<compile_context>
chip_gen: v6e
topology: v6e:2x2x1
jax: 0.10.0
libtpu: 0.0.40
codegen_flags: <defaults>
</compile_context>

<pallas_src>
import math

import jax
import jax.numpy as jnp
from jax.experimental import pallas as pl
from jax.experimental.pallas import tpu as pltpu

BN_EPS = 1e-5


# ---------------------------------------------------------------------------
# Fused kernel.  Grid = (batch, row-tile).  Per-tile refs:
#   g_ref  : (CG, Sc)   gating, already at subsampled-x resolution (bf-free f32)
#   xs_ref : (CI, Sc)   stride-subsampled x
#   x_ref  : (CI, TR*W) full-resolution x rows of this tile (bf16)
#   rh_ref : (TR, hs)   bilinear H-resize rows for this tile
#   rwt_ref: (ws, W)    bilinear W-resize matrix (transposed)
#   scratch: psi2d (hs, ws) persistent per batch element; pflat (1, TR*W).
# ---------------------------------------------------------------------------
def _make_attention_kernel(n_rows, w_full, hs, ws):

    def kernel(g_ref, xs_ref, x_ref,
               wg_ref, wi_ref, bgi_ref, wpsi_ref, bpsi_ref,
               wo_ref, bo_ref, rh_ref, rwt_ref,
               y_ref,
               psi2d_sc, pflat_sc):
        t = pl.program_id(1)

        # ---- low-resolution gate path: once per batch element ----
        @pl.when(t == 0)
        def _():
            g1 = jnp.dot(wg_ref[...], g_ref[...],
                         preferred_element_type=jnp.float32)        # (inter, Sc)
            x1 = jnp.dot(wi_ref[...], xs_ref[...],
                         preferred_element_type=jnp.float32)        # (inter, Sc)
            # per-channel biases commute with the (row-stochastic) resizes
            a = jnp.maximum(g1 + x1 + bgi_ref[...], 0.0)
            # 1-channel psi conv as VPU broadcast-multiply + sublane reduce
            logit = (jnp.sum(a * wpsi_ref[...], axis=0, keepdims=True)
                     + bpsi_ref[0, 0])                               # (1, Sc)
            psi = jax.nn.sigmoid(logit)
            # de-flatten (1, hs*ws) -> (hs, ws) scratch; static slices only
            # (no in-kernel reshape of tiled dims).
            for hi in range(hs):
                psi2d_sc[pl.ds(hi, 1), :] = psi[:, hi * ws:(hi + 1) * ws]

        # ---- full-resolution tile: separable psi upsample, O(Sp) not O(Sp^2) ----
        psi_r = jnp.dot(rh_ref[...], psi2d_sc[...],
                        preferred_element_type=jnp.float32)          # (TR, ws)
        psi_t = jnp.dot(psi_r, rwt_ref[...],
                        preferred_element_type=jnp.float32)          # (TR, W)
        # lay psi out lane-dense (1, TR*W) so the gate+store below is one
        # full-width op (unmasked vst when TR*W is a multiple of 128).
        for r in range(n_rows):
            pflat_sc[:, r * w_full:(r + 1) * w_full] = psi_t[r:r + 1, :]

        # (psi * x) @ Wout == psi * (x @ Wout): matmul first, scale after.
        z = jnp.dot(wo_ref[...], x_ref[...],
                    preferred_element_type=jnp.float32)              # (CI, TR*W)
        y_ref[...] = pflat_sc[...] * z + bo_ref[...]

    return kernel


def _pick_rows_per_tile(h, w, target_lanes=4096, max_rows=64):
    """Whole image rows per tile; keeps TR*W a multiple of 128 (or full image)."""
    if h * w <= target_lanes:
        return h
    best = h  # full image is always a legal block (equals array dims)
    tr = 8
    while tr <= min(h, max_rows):
        if h % tr == 0 and (tr * w) % 128 == 0 and tr * w <= target_lanes:
            best = tr
        tr += 8
    return best


def _attention_pallas(g_f, xs_f, x_f, wg, wi, bgi, wpsi, bpsi, wo, bo, rh, rwt,
                      *, rows_per_tile, w_full, hs, ws):
    n, cg, sc = g_f.shape
    _, ci, _ = xs_f.shape
    sp = x_f.shape[2]
    inter = wg.shape[0]
    tile = rows_per_tile * w_full
    n_tiles = sp // tile
    const2 = lambda b, t: (0, 0)  # weights / resize factors stay VMEM-resident

    def nbytes(shape, dtype):
        return math.prod(shape) * jnp.dtype(dtype).itemsize

    # shape-derived VMEM budget: 2x (double-buffered) blocks + scratch + margin.
    # 32 MiB floor is safe on every generation; cap leaves headroom under
    # physical VMEM (lower the cap to ~48 MiB on v7x if real shapes demand it).
    block_bytes = (nbytes((cg, sc), g_f.dtype) + nbytes((ci, sc), xs_f.dtype)
                   + nbytes((ci, tile), x_f.dtype) + nbytes((inter, cg), wg.dtype)
                   + nbytes((inter, ci), wi.dtype) + nbytes((inter, 1), bgi.dtype)
                   + nbytes((inter, 1), wpsi.dtype) + nbytes((ci, ci), wo.dtype)
                   + nbytes((ci, 1), bo.dtype) + nbytes((rows_per_tile, hs), rh.dtype)
                   + nbytes((ws, w_full), rwt.dtype) + nbytes((ci, tile), jnp.float32))
    scratch_bytes = nbytes((hs, ws), jnp.float32) + nbytes((1, tile), jnp.float32)
    vmem_limit = int(min(max(2 * block_bytes + scratch_bytes + 4 * 2**20,
                             32 * 2**20), 96 * 2**20))

    kernel = _make_attention_kernel(rows_per_tile, w_full, hs, ws)

    return pl.pallas_call(
        kernel,
        out_shape=jax.ShapeDtypeStruct((n, ci, sp), jnp.float32),
        grid=(n, n_tiles),
        in_specs=[
            pl.BlockSpec((None, cg, sc), lambda b, t: (b, 0, 0)),    # g (resized)
            pl.BlockSpec((None, ci, sc), lambda b, t: (b, 0, 0)),    # x subsampled
            pl.BlockSpec((None, ci, tile), lambda b, t: (b, 0, t)),  # x full, row tile
            pl.BlockSpec((inter, cg), const2),                       # Wg
            pl.BlockSpec((inter, ci), const2),                       # Wi
            pl.BlockSpec((inter, 1), const2),                        # bg + bi
            pl.BlockSpec((inter, 1), const2),                        # Wpsi
            pl.BlockSpec(memory_space=pltpu.MemorySpace.SMEM),       # bpsi scalar
            pl.BlockSpec((ci, ci), const2),                          # Wout (bf16)
            pl.BlockSpec((ci, 1), const2),                           # bout
            pl.BlockSpec((rows_per_tile, hs), lambda b, t: (t, 0)),  # Rh rows of tile
            pl.BlockSpec((ws, w_full), const2),                      # RwT
        ],
        out_specs=pl.BlockSpec((None, ci, tile), lambda b, t: (b, 0, t)),
        scratch_shapes=[pltpu.VMEM((hs, ws), jnp.float32),
                        pltpu.VMEM((1, tile), jnp.float32)],
        compiler_params=pltpu.CompilerParams(
            dimension_semantics=("parallel", "arbitrary"),  # batch across TCs (v7x)
            vmem_limit_bytes=vmem_limit),
    )(g_f, xs_f, x_f, wg, wi, bgi, wpsi, bpsi, wo, bo, rh, rwt)


# ---------------------------------------------------------------------------
# PyTorch-exact bilinear (align_corners=False) 1-D resize weights.
# ---------------------------------------------------------------------------
def _resize_matrix(in_size, out_size):
    scale = in_size / out_size
    dst = jnp.arange(out_size, dtype=jnp.float32)
    src = jnp.maximum((dst + 0.5) * scale - 0.5, 0.0)
    i0 = jnp.minimum(jnp.floor(src).astype(jnp.int32), in_size - 1)
    i1 = jnp.minimum(i0 + 1, in_size - 1)
    w1 = src - i0.astype(jnp.float32)
    w0 = 1.0 - w1
    oh0 = jax.nn.one_hot(i0, in_size, dtype=jnp.float32)
    oh1 = jax.nn.one_hot(i1, in_size, dtype=jnp.float32)
    return w0[:, None] * oh0 + w1[:, None] * oh1  # (out, in); rows sum to 1


# ---------------------------------------------------------------------------
# Parameter init (deterministic, synthetic) + eval-mode BN folding.
# ---------------------------------------------------------------------------
def _fold_bn(w, b, gamma, beta, mean, var):
    scale = gamma / jnp.sqrt(var + BN_EPS)
    return w * scale[:, None], (b - mean) * scale + beta


def init_params(key, gating_channels, in_channels):
    inter = in_channels // 2
    ks = jax.random.split(key, 8)

    def conv(k, cin, cout):
        k1, k2 = jax.random.split(k)
        bound = 1.0 / (cin ** 0.5)
        wt = jax.random.uniform(k1, (cout, cin), jnp.float32, -bound, bound)
        bv = jax.random.uniform(k2, (cout,), jnp.float32, -bound, bound)
        return wt, bv

    def bn(k, c):
        k1, k2, k3, k4 = jax.random.split(k, 4)
        gamma = 1.0 + 0.1 * jax.random.normal(k1, (c,), jnp.float32)
        beta = 0.1 * jax.random.normal(k2, (c,), jnp.float32)
        mean = 0.1 * jax.random.normal(k3, (c,), jnp.float32)
        var = 0.5 + jax.random.uniform(k4, (c,), jnp.float32)
        return gamma, beta, mean, var

    wi, bi = _fold_bn(*conv(ks[0], in_channels, inter), *bn(ks[1], inter))
    wg, bg = _fold_bn(*conv(ks[2], gating_channels, inter), *bn(ks[3], inter))
    wp, bp = _fold_bn(*conv(ks[4], inter, 1), *bn(ks[5], 1))
    wo, bo = _fold_bn(*conv(ks[6], in_channels, in_channels), *bn(ks[7], in_channels))

    return {"Wi": wi, "bi": bi, "Wg": wg, "bg": bg,
            "Wpsi": wp, "bpsi": bp, "Wout": wo, "bout": bo}


# ---------------------------------------------------------------------------
# Forward pass (PyTorch NCHW convention).
# ---------------------------------------------------------------------------
def attention_block_forward(g, x_in, params, subsample_factor=2):
    n, ci, h, w = x_in.shape
    _, cg, hg, wg_sp = g.shape
    ssf = subsample_factor
    inter = params["Wi"].shape[0]

    # stride-s 1x1 conv == strided subsample (wrapper glue) + channel matmul.
    xs = x_in[:, :, ::ssf, ::ssf]
    hs, ws = xs.shape[2], xs.shape[3]

    # Gating resize commutes exactly with the 1x1 W_gating conv; hoist it as a
    # separable wrapper resize of g.  Identity (skipped) in the canonical UNet
    # setup, so no extra HBM traffic in the common case.
    if (hg, wg_sp) != (hs, ws):
        mh = _resize_matrix(hg, hs)
        mw = _resize_matrix(wg_sp, ws)
        g = jnp.einsum("ih,nchw->nciw", mh, g)
        g = jnp.einsum("jw,nciw->ncij", mw, g)

    # NCHW -> (N, C, spatial): free reshapes.  Dominant full-res stream in bf16.
    g_f = g.reshape(n, cg, hs * ws).astype(jnp.float32)
    xs_f = xs.reshape(n, ci, hs * ws).astype(jnp.float32)
    x_f = x_in.reshape(n, ci, h * w).astype(jnp.bfloat16)

    # Separable bilinear factors for the psi upsample (O(Sp) memory).
    rh = _resize_matrix(hs, h)       # (H, hs)
    rwt = _resize_matrix(ws, w).T    # (ws, W)

    rows_per_tile = _pick_rows_per_tile(h, w)

    bgi = (params["bg"] + params["bi"]).reshape(inter, 1)
    wpsi_col = params["Wpsi"].reshape(inter, 1)
    bpsi = params["bpsi"].reshape(1, 1)
    bout = params["bout"].reshape(ci, 1)

    y = _attention_pallas(
        g_f, xs_f, x_f,
        params["Wg"], params["Wi"], bgi,
        wpsi_col, bpsi,
        params["Wout"].astype(jnp.bfloat16), bout,
        rh, rwt,
        rows_per_tile=rows_per_tile, w_full=w, hs=hs, ws=ws)
    return y.reshape(n, ci, h, w)


# ---------------------------------------------------------------------------
# Pure-JAX reference (same math, f32, NCHW) for correctness checking.
# ---------------------------------------------------------------------------
def _reference_forward(g, x_in, params, subsample_factor):
    n, ci, h, w = x_in.shape
    ssf = subsample_factor
    xs = x_in[:, :, ::ssf, ::ssf]
    hs, ws = xs.shape[2], xs.shape[3]

    def conv1x1(x, wt, bv):
        return jnp.einsum("oc,nchw->nohw", wt, x) + bv[None, :, None, None]

    def resize(x, oh, ow):
        mh = _resize_matrix(x.shape[2], oh)
        mw = _resize_matrix(x.shape[3], ow)
        y = jnp.einsum("ih,nchw->nciw", mh, x)
        return jnp.einsum("jw,nciw->ncij", mw, y)

    x1 = conv1x1(xs, params["Wi"], params["bi"])
    g1 = conv1x1(g, params["Wg"], params["bg"])
    g1u = resize(g1, hs, ws)
    psi = jax.nn.sigmoid(conv1x1(jnp.maximum(g1u + x1, 0.0),
                                 params["Wpsi"], params["bpsi"]))
    psi_up = resize(psi, h, w)
    return conv1x1(psi_up * x_in, params["Wout"], params["bout"])


if __name__ == "__main__":
    key = jax.random.PRNGKey(0)
    k_p, k_g, k_x = jax.random.split(key, 3)

    # batch=2, gating_channels=8, in_channels=8, x 16x16, gating 8x8
    N, CG, CI = 2, 8, 8
    H = W = 16
    HG = WG = 8

    params = init_params(k_p, gating_channels=CG, in_channels=CI)
    g = jax.random.normal(k_g, (N, CG, HG, WG), jnp.float32)
    x_in = jax.random.normal(k_x, (N, CI, H, W), jnp.float32)

    y = attention_block_forward(g, x_in, params, subsample_factor=2)
    y = jax.block_until_ready(y)
    assert y.shape == (N, CI, H, W), y.shape
    assert bool(jnp.all(jnp.isfinite(y)))

    y_ref = _reference_forward(g, x_in, params, 2)
    max_err = float(jnp.max(jnp.abs(y - y_ref)))
    # tolerance sized for the bf16 x/W_output path (everything else f32)
    assert max_err < 5e-2, max_err

    print("KERNEL_OK")
</pallas_src>

<mosaic_0001>
module attributes {stable_mosaic.version = 11 : i64} {
  func.func @kernel(%arg0: i32, %arg1: i32, %arg2: memref<1x8x64xf32, #tpu.memory_space<vmem>>, %arg3: memref<1x8x64xf32, #tpu.memory_space<vmem>>, %arg4: memref<1x8x256xbf16, #tpu.memory_space<vmem>>, %arg5: memref<4x8xf32, #tpu.memory_space<vmem>>, %arg6: memref<4x8xf32, #tpu.memory_space<vmem>>, %arg7: memref<4x1xf32, #tpu.memory_space<vmem>>, %arg8: memref<4x1xf32, #tpu.memory_space<vmem>>, %arg9: memref<1x1xf32, #tpu.memory_space<smem>>, %arg10: memref<8x8xbf16, #tpu.memory_space<vmem>>, %arg11: memref<8x1xf32, #tpu.memory_space<vmem>>, %arg12: memref<16x8xf32, #tpu.memory_space<vmem>>, %arg13: memref<8x16xf32, #tpu.memory_space<vmem>>, %arg14: memref<1x8x256xf32, #tpu.memory_space<vmem>>, %arg15: memref<8x8xf32, #tpu.memory_space<vmem>>, %arg16: memref<1x256xf32, #tpu.memory_space<vmem>>) attributes {dimension_semantics = [#tpu.dimension_semantics<parallel>, #tpu.dimension_semantics<arbitrary>], iteration_bounds = array<i64: 2, 1>, scalar_prefetch = 0 : i64, scratch_operands = 2 : i64, tpu.core_type = #tpu.core_type<tc>, window_params = [{transform_indices = @transform_0, window_bounds = array<i64: 1, 8, 64>}, {transform_indices = @transform_1, window_bounds = array<i64: 1, 8, 64>}, {transform_indices = @transform_2, window_bounds = array<i64: 1, 8, 256>}, {pipeline_mode = #tpu.pipeline_mode<synchronous>, transform_indices = @transform_3, window_bounds = array<i64: 4, 8>}, {pipeline_mode = #tpu.pipeline_mode<synchronous>, transform_indices = @transform_4, window_bounds = array<i64: 4, 8>}, {pipeline_mode = #tpu.pipeline_mode<synchronous>, transform_indices = @transform_5, window_bounds = array<i64: 4, 1>}, {pipeline_mode = #tpu.pipeline_mode<synchronous>, transform_indices = @transform_6, window_bounds = array<i64: 4, 1>}, {transform_indices = @transform_7, window_bounds = array<i64: 1, 1>}, {pipeline_mode = #tpu.pipeline_mode<synchronous>, transform_indices = @transform_8, window_bounds = array<i64: 8, 8>}, {pipeline_mode = #tpu.pipeline_mode<synchronous>, transform_indices = @transform_9, window_bounds = array<i64: 8, 1>}, {transform_indices = @transform_10, window_bounds = array<i64: 16, 8>}, {pipeline_mode = #tpu.pipeline_mode<synchronous>, transform_indices = @transform_11, window_bounds = array<i64: 8, 16>}, {transform_indices = @transform_12, window_bounds = array<i64: 1, 8, 256>}]} {
    %c0_i32 = arith.constant 0 : i32
    %0 = arith.cmpi eq, %arg1, %c0_i32 : i32
    %1 = arith.extui %0 : i1 to i32
    %c0_i32_0 = arith.constant 0 : i32
    %2 = arith.cmpi ne, %1, %c0_i32_0 : i32
    scf.if %2 {
      %c0_37 = arith.constant 0 : index
      %c0_38 = arith.constant 0 : index
      %53 = vector.load %arg5[%c0_37, %c0_38] : memref<4x8xf32, #tpu.memory_space<vmem>>, vector<4x8xf32>
      %c0_39 = arith.constant 0 : index
      %c0_40 = arith.constant 0 : index
      %c0_41 = arith.constant 0 : index
      %54 = vector.load %arg2[%c0_39, %c0_40, %c0_41] : memref<1x8x64xf32, #tpu.memory_space<vmem>>, vector<1x8x64xf32>
      %55 = vector.shape_cast %54 : vector<1x8x64xf32> to vector<8x64xf32>
      %cst_42 = arith.constant dense<0.000000e+00> : vector<4x64xf32>
      %56 = tpu.matmul %53, %55, %cst_42 {dimension_numbers = #tpu.dot_dimension_numbers<[1], [0], [0], [1], [0, 0, 1, 1], [], []>} : vector<4x8xf32>, vector<8x64xf32>, vector<4x64xf32> -> vector<4x64xf32>
      %c0_43 = arith.constant 0 : index
      %c0_44 = arith.constant 0 : index
      %57 = vector.load %arg6[%c0_43, %c0_44] : memref<4x8xf32, #tpu.memory_space<vmem>>, vector<4x8xf32>
      %c0_45 = arith.constant 0 : index
      %c0_46 = arith.constant 0 : index
      %c0_47 = arith.constant 0 : index
      %58 = vector.load %arg3[%c0_45, %c0_46, %c0_47] : memref<1x8x64xf32, #tpu.memory_space<vmem>>, vector<1x8x64xf32>
      %59 = vector.shape_cast %58 : vector<1x8x64xf32> to vector<8x64xf32>
      %cst_48 = arith.constant dense<0.000000e+00> : vector<4x64xf32>
      %60 = tpu.matmul %57, %59, %cst_48 {dimension_numbers = #tpu.dot_dimension_numbers<[1], [0], [0], [1], [0, 0, 1, 1], [], []>} : vector<4x8xf32>, vector<8x64xf32>, vector<4x64xf32> -> vector<4x64xf32>
      %61 = arith.addf %56, %60 : vector<4x64xf32>
      %c0_49 = arith.constant 0 : index
      %c0_50 = arith.constant 0 : index
      %62 = vector.load %arg7[%c0_49, %c0_50] : memref<4x1xf32, #tpu.memory_space<vmem>>, vector<4x1xf32>
      %63 = vector.broadcast %62 : vector<4x1xf32> to vector<4x64xf32>
      %64 = arith.addf %61, %63 : vector<4x64xf32>
      %cst_51 = arith.constant 0.000000e+00 : f32
      %65 = vector.broadcast %cst_51 : f32 to vector<4x64xf32>
      %66 = arith.maximumf %64, %65 : vector<4x64xf32>
      %c0_52 = arith.constant 0 : index
      %c0_53 = arith.constant 0 : index
      %67 = vector.load %arg8[%c0_52, %c0_53] : memref<4x1xf32, #tpu.memory_space<vmem>>, vector<4x1xf32>
      %68 = vector.broadcast %67 : vector<4x1xf32> to vector<4x64xf32>
      %69 = arith.mulf %66, %68 : vector<4x64xf32>
      %cst_54 = arith.constant dense<0.000000e+00> : vector<64xf32>
      %70 = vector.multi_reduction <add>, %69, %cst_54 [0] : vector<4x64xf32> to vector<64xf32>
      %71 = vector.shape_cast %70 : vector<64xf32> to vector<1x64xf32>
      %c0_55 = arith.constant 0 : index
      %c0_56 = arith.constant 0 : index
      %72 = memref.load %arg9[%c0_55, %c0_56] : memref<1x1xf32, #tpu.memory_space<smem>>
      %73 = vector.broadcast %72 : f32 to vector<1x64xf32>
      %74 = arith.addf %71, %73 : vector<1x64xf32>
      %75 = arith.negf %74 : vector<1x64xf32>
      %76 = math.exp %75 : vector<1x64xf32>
      %cst_57 = arith.constant 1.000000e+00 : f32
      %77 = vector.broadcast %cst_57 : f32 to vector<1x64xf32>
      %78 = arith.addf %77, %76 : vector<1x64xf32>
      %79 = arith.divf %77, %78 : vector<1x64xf32>
      %80 = vector.extract_strided_slice %79 {offsets = [0, 0], sizes = [1, 8], strides = [1, 1]} : vector<1x64xf32> to vector<1x8xf32>
      %c0_58 = arith.constant 0 : index
      %c0_59 = arith.constant 0 : index
      %81 = vector.load %arg15[%c0_58, %c0_59] : memref<8x8xf32, #tpu.memory_space<vmem>>, vector<1x8xf32>
      tpu.vector_store %arg15[%c0_58, %c0_59], %80 {strides = array<i32>} : memref<8x8xf32, #tpu.memory_space<vmem>>, vector<1x8xf32>,
      %82 = vector.extract_strided_slice %79 {offsets = [0, 8], sizes = [1, 8], strides = [1, 1]} : vector<1x64xf32> to vector<1x8xf32>
      %c1 = arith.constant 1 : index
      %c0_60 = arith.constant 0 : index
      %83 = vector.load %arg15[%c1, %c0_60] : memref<8x8xf32, #tpu.memory_space<vmem>>, vector<1x8xf32>
      tpu.vector_store %arg15[%c1, %c0_60], %82 {strides = array<i32>} : memref<8x8xf32, #tpu.memory_space<vmem>>, vector<1x8xf32>,
      %84 = vector.extract_strided_slice %79 {offsets = [0, 16], sizes = [1, 8], strides = [1, 1]} : vector<1x64xf32> to vector<1x8xf32>
      %c2 = arith.constant 2 : index
      %c0_61 = arith.constant 0 : index
      %85 = vector.load %arg15[%c2, %c0_61] : memref<8x8xf32, #tpu.memory_space<vmem>>, vector<1x8xf32>
      tpu.vector_store %arg15[%c2, %c0_61], %84 {strides = array<i32>} : memref<8x8xf32, #tpu.memory_space<vmem>>, vector<1x8xf32>,
      %86 = vector.extract_strided_slice %79 {offsets = [0, 24], sizes = [1, 8], strides = [1, 1]} : vector<1x64xf32> to vector<1x8xf32>
      %c3 = arith.constant 3 : index
      %c0_62 = arith.constant 0 : index
      %87 = vector.load %arg15[%c3, %c0_62] : memref<8x8xf32, #tpu.memory_space<vmem>>, vector<1x8xf32>
      tpu.vector_store %arg15[%c3, %c0_62], %86 {strides = array<i32>} : memref<8x8xf32, #tpu.memory_space<vmem>>, vector<1x8xf32>,
      %88 = vector.extract_strided_slice %79 {offsets = [0, 32], sizes = [1, 8], strides = [1, 1]} : vector<1x64xf32> to vector<1x8xf32>
      %c4 = arith.constant 4 : index
      %c0_63 = arith.constant 0 : index
      %89 = vector.load %arg15[%c4, %c0_63] : memref<8x8xf32, #tpu.memory_space<vmem>>, vector<1x8xf32>
      tpu.vector_store %arg15[%c4, %c0_63], %88 {strides = array<i32>} : memref<8x8xf32, #tpu.memory_space<vmem>>, vector<1x8xf32>,
      %90 = vector.extract_strided_slice %79 {offsets = [0, 40], sizes = [1, 8], strides = [1, 1]} : vector<1x64xf32> to vector<1x8xf32>
      %c5 = arith.constant 5 : index
      %c0_64 = arith.constant 0 : index
      %91 = vector.load %arg15[%c5, %c0_64] : memref<8x8xf32, #tpu.memory_space<vmem>>, vector<1x8xf32>
      tpu.vector_store %arg15[%c5, %c0_64], %90 {strides = array<i32>} : memref<8x8xf32, #tpu.memory_space<vmem>>, vector<1x8xf32>,
      %92 = vector.extract_strided_slice %79 {offsets = [0, 48], sizes = [1, 8], strides = [1, 1]} : vector<1x64xf32> to vector<1x8xf32>
      %c6 = arith.constant 6 : index
      %c0_65 = arith.constant 0 : index
      %93 = vector.load %arg15[%c6, %c0_65] : memref<8x8xf32, #tpu.memory_space<vmem>>, vector<1x8xf32>
      tpu.vector_store %arg15[%c6, %c0_65], %92 {strides = array<i32>} : memref<8x8xf32, #tpu.memory_space<vmem>>, vector<1x8xf32>,
      %94 = vector.extract_strided_slice %79 {offsets = [0, 56], sizes = [1, 8], strides = [1, 1]} : vector<1x64xf32> to vector<1x8xf32>
      %c7 = arith.constant 7 : index
      %c0_66 = arith.constant 0 : index
      %95 = vector.load %arg15[%c7, %c0_66] : memref<8x8xf32, #tpu.memory_space<vmem>>, vector<1x8xf32>
      tpu.vector_store %arg15[%c7, %c0_66], %94 {strides = array<i32>} : memref<8x8xf32, #tpu.memory_space<vmem>>, vector<1x8xf32>,
    } else {
    }
    %c0 = arith.constant 0 : index
    %c0_1 = arith.constant 0 : index
    %3 = vector.load %arg12[%c0, %c0_1] : memref<16x8xf32, #tpu.memory_space<vmem>>, vector<16x8xf32>
    %c0_2 = arith.constant 0 : index
    %c0_3 = arith.constant 0 : index
    %4 = vector.load %arg15[%c0_2, %c0_3] : memref<8x8xf32, #tpu.memory_space<vmem>>, vector<8x8xf32>
    %cst = arith.constant dense<0.000000e+00> : vector<16x8xf32>
    %5 = tpu.matmul %3, %4, %cst {dimension_numbers = #tpu.dot_dimension_numbers<[1], [0], [0], [1], [0, 0, 1, 1], [], []>} : vector<16x8xf32>, vector<8x8xf32>, vector<16x8xf32> -> vector<16x8xf32>
    %c0_4 = arith.constant 0 : index
    %c0_5 = arith.constant 0 : index
    %6 = vector.load %arg13[%c0_4, %c0_5] : memref<8x16xf32, #tpu.memory_space<vmem>>, vector<8x16xf32>
    %cst_6 = arith.constant dense<0.000000e+00> : vector<16x16xf32>
    %7 = tpu.matmul %5, %6, %cst_6 {dimension_numbers = #tpu.dot_dimension_numbers<[1], [0], [0], [1], [0, 0, 1, 1], [], []>} : vector<16x8xf32>, vector<8x16xf32>, vector<16x16xf32> -> vector<16x16xf32>
    %8 = vector.extract_strided_slice %7 {offsets = [0, 0], sizes = [1, 16], strides = [1, 1]} : vector<16x16xf32> to vector<1x16xf32>
    %c0_7 = arith.constant 0 : index
    %c0_8 = arith.constant 0 : index
    %9 = vector.load %arg16[%c0_7, %c0_8] : memref<1x256xf32, #tpu.memory_space<vmem>>, vector<1x16xf32>
    tpu.vector_store %arg16[%c0_7, %c0_8], %8 {strides = array<i32>} : memref<1x256xf32, #tpu.memory_space<vmem>>, vector<1x16xf32>,
    %10 = vector.extract_strided_slice %7 {offsets = [1, 0], sizes = [1, 16], strides = [1, 1]} : vector<16x16xf32> to vector<1x16xf32>
    %c0_9 = arith.constant 0 : index
    %c16 = arith.constant 16 : index
    %11 = vector.load %arg16[%c0_9, %c16] : memref<1x256xf32, #tpu.memory_space<vmem>>, vector<1x16xf32>
    tpu.vector_store %arg16[%c0_9, %c16], %10 {strides = array<i32>} : memref<1x256xf32, #tpu.memory_space<vmem>>, vector<1x16xf32>,
    %12 = vector.extract_strided_slice %7 {offsets = [2, 0], sizes = [1, 16], strides = [1, 1]} : vector<16x16xf32> to vector<1x16xf32>
    %c0_10 = arith.constant 0 : index
    %c32 = arith.constant 32 : index
    %13 = vector.load %arg16[%c0_10, %c32] : memref<1x256xf32, #tpu.memory_space<vmem>>, vector<1x16xf32>
    tpu.vector_store %arg16[%c0_10, %c32], %12 {strides = array<i32>} : memref<1x256xf32, #tpu.memory_space<vmem>>, vector<1x16xf32>,
    %14 = vector.extract_strided_slice %7 {offsets = [3, 0], sizes = [1, 16], strides = [1, 1]} : vector<16x16xf32> to vector<1x16xf32>
    %c0_11 = arith.constant 0 : index
    %c48 = arith.constant 48 : index
    %15 = vector.load %arg16[%c0_11, %c48] : memref<1x256xf32, #tpu.memory_space<vmem>>, vector<1x16xf32>
    tpu.vector_store %arg16[%c0_11, %c48], %14 {strides = array<i32>} : memref<1x256xf32, #tpu.memory_space<vmem>>, vector<1x16xf32>,
    %16 = vector.extract_strided_slice %7 {offsets = [4, 0], sizes = [1, 16], strides = [1, 1]} : vector<16x16xf32> to vector<1x16xf32>
    %c0_12 = arith.constant 0 : index
    %c64 = arith.constant 64 : index
    %17 = vector.load %arg16[%c0_12, %c64] : memref<1x256xf32, #tpu.memory_space<vmem>>, vector<1x16xf32>
    tpu.vector_store %arg16[%c0_12, %c64], %16 {strides = array<i32>} : memref<1x256xf32, #tpu.memory_space<vmem>>, vector<1x16xf32>,
    %18 = vector.extract_strided_slice %7 {offsets = [5, 0], sizes = [1, 16], strides = [1, 1]} : vector<16x16xf32> to vector<1x16xf32>
    %c0_13 = arith.constant 0 : index
    %c80 = arith.constant 80 : index
    %19 = vector.load %arg16[%c0_13, %c80] : memref<1x256xf32, #tpu.memory_space<vmem>>, vector<1x16xf32>
    tpu.vector_store %arg16[%c0_13, %c80], %18 {strides = array<i32>} : memref<1x256xf32, #tpu.memory_space<vmem>>, vector<1x16xf32>,
    %20 = vector.extract_strided_slice %7 {offsets = [6, 0], sizes = [1, 16], strides = [1, 1]} : vector<16x16xf32> to vector<1x16xf32>
    %c0_14 = arith.constant 0 : index
    %c96 = arith.constant 96 : index
    %21 = vector.load %arg16[%c0_14, %c96] : memref<1x256xf32, #tpu.memory_space<vmem>>, vector<1x16xf32>
    tpu.vector_store %arg16[%c0_14, %c96], %20 {strides = array<i32>} : memref<1x256xf32, #tpu.memory_space<vmem>>, vector<1x16xf32>,
    %22 = vector.extract_strided_slice %7 {offsets = [7, 0], sizes = [1, 16], strides = [1, 1]} : vector<16x16xf32> to vector<1x16xf32>
    %c0_15 = arith.constant 0 : index
    %c112 = arith.constant 112 : index
    %23 = vector.load %arg16[%c0_15, %c112] : memref<1x256xf32, #tpu.memory_space<vmem>>, vector<1x16xf32>
    tpu.vector_store %arg16[%c0_15, %c112], %22 {strides = array<i32>} : memref<1x256xf32, #tpu.memory_space<vmem>>, vector<1x16xf32>,
    %24 = vector.extract_strided_slice %7 {offsets = [8, 0], sizes = [1, 16], strides = [1, 1]} : vector<16x16xf32> to vector<1x16xf32>
    %c0_16 = arith.constant 0 : index
    %c128 = arith.constant 128 : index
    %25 = vector.load %arg16[%c0_16, %c128] : memref<1x256xf32, #tpu.memory_space<vmem>>, vector<1x16xf32>
    tpu.vector_store %arg16[%c0_16, %c128], %24 {strides = array<i32>} : memref<1x256xf32, #tpu.memory_space<vmem>>, vector<1x16xf32>,
    %26 = vector.extract_strided_slice %7 {offsets = [9, 0], sizes = [1, 16], strides = [1, 1]} : vector<16x16xf32> to vector<1x16xf32>
    %c0_17 = arith.constant 0 : index
    %c144 = arith.constant 144 : index
    %27 = vector.load %arg16[%c0_17, %c144] : memref<1x256xf32, #tpu.memory_space<vmem>>, vector<1x16xf32>
    tpu.vector_store %arg16[%c0_17, %c144], %26 {strides = array<i32>} : memref<1x256xf32, #tpu.memory_space<vmem>>, vector<1x16xf32>,
    %28 = vector.extract_strided_slice %7 {offsets = [10, 0], sizes = [1, 16], strides = [1, 1]} : vector<16x16xf32> to vector<1x16xf32>
    %c0_18 = arith.constant 0 : index
    %c160 = arith.constant 160 : index
    %29 = vector.load %arg16[%c0_18, %c160] : memref<1x256xf32, #tpu.memory_space<vmem>>, vector<1x16xf32>
    tpu.vector_store %arg16[%c0_18, %c160], %28 {strides = array<i32>} : memref<1x256xf32, #tpu.memory_space<vmem>>, vector<1x16xf32>,
    %30 = vector.extract_strided_slice %7 {offsets = [11, 0], sizes = [1, 16], strides = [1, 1]} : vector<16x16xf32> to vector<1x16xf32>
    %c0_19 = arith.constant 0 : index
    %c176 = arith.constant 176 : index
    %31 = vector.load %arg16[%c0_19, %c176] : memref<1x256xf32, #tpu.memory_space<vmem>>, vector<1x16xf32>
    tpu.vector_store %arg16[%c0_19, %c176], %30 {strides = array<i32>} : memref<1x256xf32, #tpu.memory_space<vmem>>, vector<1x16xf32>,
    %32 = vector.extract_strided_slice %7 {offsets = [12, 0], sizes = [1, 16], strides = [1, 1]} : vector<16x16xf32> to vector<1x16xf32>
    %c0_20 = arith.constant 0 : index
    %c192 = arith.constant 192 : index
    %33 = vector.load %arg16[%c0_20, %c192] : memref<1x256xf32, #tpu.memory_space<vmem>>, vector<1x16xf32>
    tpu.vector_store %arg16[%c0_20, %c192], %32 {strides = array<i32>} : memref<1x256xf32, #tpu.memory_space<vmem>>, vector<1x16xf32>,
    %34 = vector.extract_strided_slice %7 {offsets = [13, 0], sizes = [1, 16], strides = [1, 1]} : vector<16x16xf32> to vector<1x16xf32>
    %c0_21 = arith.constant 0 : index
    %c208 = arith.constant 208 : index
    %35 = vector.load %arg16[%c0_21, %c208] : memref<1x256xf32, #tpu.memory_space<vmem>>, vector<1x16xf32>
    tpu.vector_store %arg16[%c0_21, %c208], %34 {strides = array<i32>} : memref<1x256xf32, #tpu.memory_space<vmem>>, vector<1x16xf32>,
    %36 = vector.extract_strided_slice %7 {offsets = [14, 0], sizes = [1, 16], strides = [1, 1]} : vector<16x16xf32> to vector<1x16xf32>
    %c0_22 = arith.constant 0 : index
    %c224 = arith.constant 224 : index
    %37 = vector.load %arg16[%c0_22, %c224] : memref<1x256xf32, #tpu.memory_space<vmem>>, vector<1x16xf32>
    tpu.vector_store %arg16[%c0_22, %c224], %36 {strides = array<i32>} : memref<1x256xf32, #tpu.memory_space<vmem>>, vector<1x16xf32>,
    %38 = vector.extract_strided_slice %7 {offsets = [15, 0], sizes = [1, 16], strides = [1, 1]} : vector<16x16xf32> to vector<1x16xf32>
    %c0_23 = arith.constant 0 : index
    %c240 = arith.constant 240 : index
    %39 = vector.load %arg16[%c0_23, %c240] : memref<1x256xf32, #tpu.memory_space<vmem>>, vector<1x16xf32>
    tpu.vector_store %arg16[%c0_23, %c240], %38 {strides = array<i32>} : memref<1x256xf32, #tpu.memory_space<vmem>>, vector<1x16xf32>,
    %c0_24 = arith.constant 0 : index
    %c0_25 = arith.constant 0 : index
    %40 = vector.load %arg10[%c0_24, %c0_25] : memref<8x8xbf16, #tpu.memory_space<vmem>>, vector<8x8xbf16>
    %c0_26 = arith.constant 0 : index
    %c0_27 = arith.constant 0 : index
    %c0_28 = arith.constant 0 : index
    %41 = vector.load %arg4[%c0_26, %c0_27, %c0_28] : memref<1x8x256xbf16, #tpu.memory_space<vmem>>, vector<1x8x256xbf16>
    %42 = vector.shape_cast %41 : vector<1x8x256xbf16> to vector<8x256xbf16>
    %cst_29 = arith.constant dense<0.000000e+00> : vector<8x256xf32>
    %43 = tpu.matmul %40, %42, %cst_29 {dimension_numbers = #tpu.dot_dimension_numbers<[1], [0], [0], [1], [0, 0, 1, 1], [], []>} : vector<8x8xbf16>, vector<8x256xbf16>, vector<8x256xf32> -> vector<8x256xf32>
    %c0_30 = arith.constant 0 : index
    %c0_31 = arith.constant 0 : index
    %44 = vector.load %arg16[%c0_30, %c0_31] : memref<1x256xf32, #tpu.memory_space<vmem>>, vector<1x256xf32>
    %45 = vector.broadcast %44 : vector<1x256xf32> to vector<8x256xf32>
    %46 = arith.mulf %45, %43 : vector<8x256xf32>
    %c0_32 = arith.constant 0 : index
    %c0_33 = arith.constant 0 : index
    %47 = vector.load %arg11[%c0_32, %c0_33] : memref<8x1xf32, #tpu.memory_space<vmem>>, vector<8x1xf32>
    %48 = vector.broadcast %47 : vector<8x1xf32> to vector<8x256xf32>
    %49 = arith.addf %46, %48 : vector<8x256xf32>
    %c0_34 = arith.constant 0 : index
    %c0_35 = arith.constant 0 : index
    %c0_36 = arith.constant 0 : index
    %50 = vector.load %arg14[%c0_34, %c0_35, %c0_36] : memref<1x8x256xf32, #tpu.memory_space<vmem>>, vector<1x8x256xf32>
    %51 = vector.shape_cast %50 : vector<1x8x256xf32> to vector<8x256xf32>
    %52 = vector.shape_cast %49 : vector<8x256xf32> to vector<1x8x256xf32>
    tpu.vector_store %arg14[%c0_34, %c0_35, %c0_36], %52 {strides = array<i32>} : memref<1x8x256xf32, #tpu.memory_space<vmem>>, vector<1x8x256xf32>,
    return
  }
  func.func @transform_0(%arg0: i32, %arg1: i32) -> (i32, i32, i32) {
    %c0_i32 = arith.constant 0 : i32
    %c0_i32_0 = arith.constant 0 : i32
    %c0_i32_1 = arith.constant 0 : i32
    return %arg0, %c0_i32, %c0_i32_0 : i32, i32, i32
  }
  func.func @transform_1(%arg0: i32, %arg1: i32) -> (i32, i32, i32) {
    %c0_i32 = arith.constant 0 : i32
    %c0_i32_0 = arith.constant 0 : i32
    %c0_i32_1 = arith.constant 0 : i32
    return %arg0, %c0_i32, %c0_i32_0 : i32, i32, i32
  }
  func.func @transform_2(%arg0: i32, %arg1: i32) -> (i32, i32, i32) {
    %c0_i32 = arith.constant 0 : i32
    %c0_i32_0 = arith.constant 0 : i32
    return %arg0, %c0_i32, %arg1 : i32, i32, i32
  }
  func.func @transform_3(%arg0: i32, %arg1: i32) -> (i32, i32) {
    %c0_i32 = arith.constant 0 : i32
    %c0_i32_0 = arith.constant 0 : i32
    %c0_i32_1 = arith.constant 0 : i32
    return %c0_i32, %c0_i32_0 : i32, i32
  }
  func.func @transform_4(%arg0: i32, %arg1: i32) -> (i32, i32) {
    %c0_i32 = arith.constant 0 : i32
    %c0_i32_0 = arith.constant 0 : i32
    %c0_i32_1 = arith.constant 0 : i32
    return %c0_i32, %c0_i32_0 : i32, i32
  }
  func.func @transform_5(%arg0: i32, %arg1: i32) -> (i32, i32) {
    %c0_i32 = arith.constant 0 : i32
    %c0_i32_0 = arith.constant 0 : i32
    %c0_i32_1 = arith.constant 0 : i32
    return %c0_i32, %c0_i32_0 : i32, i32
  }
  func.func @transform_6(%arg0: i32, %arg1: i32) -> (i32, i32) {
    %c0_i32 = arith.constant 0 : i32
    %c0_i32_0 = arith.constant 0 : i32
    %c0_i32_1 = arith.constant 0 : i32
    return %c0_i32, %c0_i32_0 : i32, i32
  }
  func.func @transform_7(%arg0: i32, %arg1: i32) -> (i32, i32) {
    %c0_i32 = arith.constant 0 : i32
    %c0_i32_0 = arith.constant 0 : i32
    %c0_i32_1 = arith.constant 0 : i32
    return %c0_i32, %c0_i32_0 : i32, i32
  }
  func.func @transform_8(%arg0: i32, %arg1: i32) -> (i32, i32) {
    %c0_i32 = arith.constant 0 : i32
    %c0_i32_0 = arith.constant 0 : i32
    %c0_i32_1 = arith.constant 0 : i32
    return %c0_i32, %c0_i32_0 : i32, i32
  }
  func.func @transform_9(%arg0: i32, %arg1: i32) -> (i32, i32) {
    %c0_i32 = arith.constant 0 : i32
    %c0_i32_0 = arith.constant 0 : i32
    %c0_i32_1 = arith.constant 0 : i32
    return %c0_i32, %c0_i32_0 : i32, i32
  }
  func.func @transform_10(%arg0: i32, %arg1: i32) -> (i32, i32) {
    %c0_i32 = arith.constant 0 : i32
    %c0_i32_0 = arith.constant 0 : i32
    return %arg1, %c0_i32 : i32, i32
  }
  func.func @transform_11(%arg0: i32, %arg1: i32) -> (i32, i32) {
    %c0_i32 = arith.constant 0 : i32
    %c0_i32_0 = arith.constant 0 : i32
    %c0_i32_1 = arith.constant 0 : i32
    return %c0_i32, %c0_i32_0 : i32, i32
  }
  func.func @transform_12(%arg0: i32, %arg1: i32) -> (i32, i32, i32) {
    %c0_i32 = arith.constant 0 : i32
    %c0_i32_0 = arith.constant 0 : i32
    return %arg0, %c0_i32, %arg1 : i32, i32, i32
  }
}

</mosaic_0001>

<llo_original>
// kernel: tpu_custom_call.1
$region0: #{tpu_custom_call.1}
  #allocation0 [shape = 'u32[]', space=smem, size = 0x4, offset = 0x4, fixed_abs, tag = 'smem constant byte address 0x4 - core index']
  #allocation1 [shape = 'u32[144,128]{1,0:T(1,128)}', space=vmem, size = 0x12000, scoped, tag = 'internal scratch']
  #allocation2 [shape = 'f32[8,8]{1,0:T(8,128)}', space=vmem, size = 0x1000, scoped, tag = 'scratch operand']
  #allocation3 [shape = 'f32[1,256]{1,0:T(1,128)}', space=vmem, size = 0x400, scoped, tag = 'scratch operand']
  #allocation4 [shape = 'f32[1,1]{1,0:T(1,128)S(6)}', space=smem, size = 0x200, scoped, tag = 'scoped memory for tpu_custom_call.1']
  %s0 = inlined_call_operand.vmem [shape: f32[2,8,64], index: 0, kind: input, shape index: {}]
  %s1 = inlined_call_operand.vmem [shape: f32[2,8,64], index: 1, kind: input, shape index: {}]
  %s2 = inlined_call_operand.vmem [shape: bf16[2,8,256], index: 2, kind: input, shape index: {}]
  %s3 = inlined_call_operand.hbm [shape: f32[4,8], index: 3, kind: input, shape index: {}]
  %s4 = inlined_call_operand.hbm [shape: f32[4,8], index: 4, kind: input, shape index: {}]
  %s5 = inlined_call_operand.vmem [shape: f32[4,1], index: 5, kind: input, shape index: {}]
  %s6 = inlined_call_operand.vmem [shape: f32[4,1], index: 6, kind: input, shape index: {}]
  %s7 = inlined_call_operand.<no memory space> [shape: f32[1,1], index: 7, kind: input, shape index: {}]
  %s8 = inlined_call_operand.hbm [shape: bf16[8,8], index: 8, kind: input, shape index: {}]
  %s9 = inlined_call_operand.vmem [shape: f32[8,1], index: 9, kind: input, shape index: {}]
  %s10 = inlined_call_operand.vmem [shape: f32[16,8], index: 10, kind: input, shape index: {}]
  %s11 = inlined_call_operand.vmem [shape: f32[8,16], index: 11, kind: input, shape index: {}]
  %s12 = inlined_call_operand.hbm [shape: f32[2,8,256], index: 12, kind: output, shape index: {}]
  %s13 = sld [smem:[#allocation0]]
  $region97: #{tpu_custom_call.1} parent=0
    _
  %s15 = ssub.s32 1, %s13
  %s16 = scalar_select 0, %s15, %s13
  %17 = sst [smem:[#allocation4]] %s7
  $region1: #{tpu_custom_call.1} parent=0
    #allocation5 [shape = 'u8[2048]{0}', space=vmem, size = 0x800, scoped, tag = 'input window, operand 3, single buffered']
    #allocation6 [shape = 's32[2]{0}', space=sflag, size = 0x8, scoped, tag = 'scoped memory for tpu_custom_call.1']
    #allocation7 [shape = 's32[2]{0}', space=sflag, size = 0x8, scoped, tag = 'scoped memory for tpu_custom_call.1']
    #allocation8 [shape = 'u8[2048]{0}', space=vmem, size = 0x800, scoped, tag = 'input window, operand 4, single buffered']
    #allocation9 [shape = 's32[1]{0}', space=sflag, size = 0x4, scoped, tag = 'scoped memory for tpu_custom_call.1']
    #allocation10 [shape = 'u8[2048]{0}', space=vmem, size = 0x800, scoped, tag = 'input window, operand 8, single buffered']
    #allocation11 [shape = 'u8[16384]{0}', space=vmem, size = 0x4000, scoped, tag = 'output window, operand 0']
    %18 = vsyncpa [#allocation6], 0
    %19 = vsyncpa [#allocation9], 0
    %20 = vsyncpa [#allocation7], 0
    %s21 = scalar_lea.sflag [#allocation7], 1
    %22 = vsyncpa %s21, 0
    loop: start=0, step=1, limit=4
    $region2: #{tpu_custom_call.1} parent=1 // loop_pre_header
      _
    $region3: #{tpu_custom_call.1} parent=1 // loop_header
      %s24 = sphi 0, %s28
      %p25 = scmp.ge.s32.totalorder %s24, 4
      %s31 = sphi 0, %s43
      %s32 = sphi 0, %s39
      %s33 = sphi 0, %s31
      %s34 = sphi 0, %s32
      %s35 = sphi 0, %s33
      %s36 = sphi 0, %s34
      %s46 = sphi 0, %s48
      %s49 = sphi 0, %s46
      %s50 = sphi 0, %s49
      %s66 = sphi 0, %s50
      %s72 = sphi 0, %s74
      %s75 = sphi 0, %s72
      %s76 = sphi 0, %s75
      %s92 = sphi 0, %s76
      %s100 = sphi 0, %s102
      %s103 = sphi 0, %s100
      %s104 = sphi 0, %s103
      %s120 = sphi 0, %s104
      %s124 = sphi 0, %s124
      %s126 = sphi 0, %s124
      %s127 = sphi 0, %s126
      %s141 = sphi 0, %s127
      %s145 = sphi 0, %s145
      %s147 = sphi 0, %s145
      %s148 = sphi 0, %s147
      %s162 = sphi 0, %s148
      %s166 = sphi 0, %s166
      %s168 = sphi 0, %s166
      %s169 = sphi 0, %s168
      %s183 = sphi 0, %s169
      %s187 = sphi 0, %s187
      %s189 = sphi 0, %s187
      %s190 = sphi 0, %s189
      %s204 = sphi 0, %s190
      %s208 = sphi 0, %s208
      %s210 = sphi 0, %s208
      %s211 = sphi 0, %s210
      %s225 = sphi 0, %s211
      %s229 = sphi 0, %s229
      %s231 = sphi 0, %s229
      %s232 = sphi 0, %s231
      %s246 = sphi 0, %s232
      %s250 = sphi 0, %s250
      %s252 = sphi 0, %s250
      %s253 = sphi 0, %s252
      %s267 = sphi 0, %s253
      %s273 = sphi 0, %s275
      %s276 = sphi 0, %s273
      %s277 = sphi 0, %s276
      %s293 = sphi 0, %s277
      %s297 = sphi 0, %s297
      %s299 = sphi 0, %s297
      %s300 = sphi 0, %s299
      %s314 = sphi 0, %s300
      %s322 = sphi 0, %s324
      %s325 = sphi 0, %s322
      %s326 = sphi 0, %s325
      %s342 = sphi 0, %s326
    $region4: #{tpu_custom_call.1} parent=1 // loop_header_branch
      %27 = sbr.rel (%p25) target = $region8
    $region5: #{tpu_custom_call.1} parent=1 // loop_body
      %s29 = ssub.s32 %s24, 1
      %s30 = ssub.s32 %s24, 2
      %s37 = sadd.s32 1, %s32
      %p38 = scmp.ge.s32.totalorder %s37, 1
      %s39 = scalar_select %p38, 0, %s37
      %s40 = sadd.s32 1, %s31
      %s41 = scalar_select %p38, %s40, %s31
      %p42 = scmp.ge.s32.totalorder %s41, 2
      %s43 = scalar_select %p42, 0, %s41
      %s44 = ssub.s32 %s31, %s43
      %p45 = scmp.eq.s32.totalorder %s44, 0
      %s47 = sadd.s32 %s46, 1
      %s48 = scalar_select %p45, %s46, %s47
      %p51 = pneg %p45
      %p52 = scmp.eq.s32.totalorder %s24, 1
      %p53 = por %p51, %p52
      %p54 = scmp.ne.s32.totalorder %s46, %s49
      %p55 = scmp.eq.s32.totalorder %s24, 0
      %p56 = por %p54, %p55
      %p57 = scmp.ne.s32.totalorder %s46, %s49
      %p58 = scmp.eq.s32.totalorder %s29, 1
      %p59 = por %p57, %p58
      %p60 = scmp.ne.s32.totalorder %s49, %s50
      %p61 = scmp.eq.s32.totalorder %s29, 0
      %p62 = por %p60, %p61
      %p63 = scmp.ne.s32.totalorder %s49, %s50
      %p64 = scmp.eq.s32.totalorder %s30, 1
      %p65 = por %p63, %p64
      %p67 = scmp.ne.s32.totalorder %s50, %s66
      %p68 = scmp.eq.s32.totalorder %s30, 0
      %p69 = por %p67, %p68
      %s70 = ssub.s32 %s31, %s43
      %p71 = scmp.eq.s32.totalorder %s70, 0
      %s73 = sadd.s32 %s72, 1
      %s74 = scalar_select %p71, %s72, %s73
      %p77 = pneg %p71
      %p78 = scmp.eq.s32.totalorder %s24, 1
      %p79 = por %p77, %p78
      %p80 = scmp.ne.s32.totalorder %s72, %s75
      %p81 = scmp.eq.s32.totalorder %s24, 0
      %p82 = por %p80, %p81
      %p83 = scmp.ne.s32.totalorder %s72, %s75
      %p84 = scmp.eq.s32.totalorder %s29, 1
      %p85 = por %p83, %p84
      %p86 = scmp.ne.s32.totalorder %s75, %s76
      %p87 = scmp.eq.s32.totalorder %s29, 0
      %p88 = por %p86, %p87
      %p89 = scmp.ne.s32.totalorder %s75, %s76
      %p90 = scmp.eq.s32.totalorder %s30, 1
      %p91 = por %p89, %p90
      %p93 = scmp.ne.s32.totalorder %s76, %s92
      %p94 = scmp.eq.s32.totalorder %s30, 0
      %p95 = por %p93, %p94
      %s96 = ssub.s32 %s31, %s43
      %s97 = ssub.s32 %s32, %s39
      %s98 = sor.u32 %s96, %s97
      %p99 = scmp.eq.s32.totalorder %s98, 0
      %s101 = sadd.s32 %s100, 1
      %s102 = scalar_select %p99, %s100, %s101
      %p105 = pneg %p99
      %p106 = scmp.eq.s32.totalorder %s24, 1
      %p107 = por %p105, %p106
      %p108 = scmp.ne.s32.totalorder %s100, %s103
      %p109 = scmp.eq.s32.totalorder %s24, 0
      %p110 = por %p108, %p109
      %p111 = scmp.ne.s32.totalorder %s100, %s103
      %p112 = scmp.eq.s32.totalorder %s29, 1
      %p113 = por %p111, %p112
      %p114 = scmp.ne.s32.totalorder %s103, %s104
      %p115 = scmp.eq.s32.totalorder %s29, 0
      %p116 = por %p114, %p115
      %p117 = scmp.ne.s32.totalorder %s103, %s104
      %p118 = scmp.eq.s32.totalorder %s30, 1
      %p119 = por %p117, %p118
      %p121 = scmp.ne.s32.totalorder %s104, %s120
      %p122 = scmp.eq.s32.totalorder %s30, 0
      %p123 = por %p121, %p122
      %s125 = sadd.s32 %s124, 1
      %p128 = scmp.eq.s32.totalorder %s24, 1
      %p129 = scmp.ne.s32.totalorder %s124, %s126
      %p130 = scmp.eq.s32.totalorder %s24, 0
      %p131 = por %p129, %p130
      %p132 = scmp.ne.s32.totalorder %s124, %s126
      %p133 = scmp.eq.s32.totalorder %s29, 1
      %p134 = por %p132, %p133
      %p135 = scmp.ne.s32.totalorder %s126, %s127
      %p136 = scmp.eq.s32.totalorder %s29, 0
      %p137 = por %p135, %p136
      %p138 = scmp.ne.s32.totalorder %s126, %s127
      %p139 = scmp.eq.s32.totalorder %s30, 1
      %p140 = por %p138, %p139
      %p142 = scmp.ne.s32.totalorder %s127, %s141
      %p143 = scmp.eq.s32.totalorder %s30, 0
      %p144 = por %p142, %p143
      %s146 = sadd.s32 %s145, 1
      %p149 = scmp.eq.s32.totalorder %s24, 1
      %p150 = scmp.ne.s32.totalorder %s145, %s147
      %p151 = scmp.eq.s32.totalorder %s24, 0
      %p152 = por %p150, %p151
      %p153 = scmp.ne.s32.totalorder %s145, %s147
      %p154 = scmp.eq.s32.totalorder %s29, 1
      %p155 = por %p153, %p154
      %p156 = scmp.ne.s32.totalorder %s147, %s148
      %p157 = scmp.eq.s32.totalorder %s29, 0
      %p158 = por %p156, %p157
      %p159 = scmp.ne.s32.totalorder %s147, %s148
      %p160 = scmp.eq.s32.totalorder %s30, 1
      %p161 = por %p159, %p160
      %p163 = scmp.ne.s32.totalorder %s148, %s162
      %p164 = scmp.eq.s32.totalorder %s30, 0
      %p165 = por %p163, %p164
      %s167 = sadd.s32 %s166, 1
      %p170 = scmp.eq.s32.totalorder %s24, 1
      %p171 = scmp.ne.s32.totalorder %s166, %s168
      %p172 = scmp.eq.s32.totalorder %s24, 0
      %p173 = por %p171, %p172
      %p174 = scmp.ne.s32.totalorder %s166, %s168
      %p175 = scmp.eq.s32.totalorder %s29, 1
      %p176 = por %p174, %p175
      %p177 = scmp.ne.s32.totalorder %s168, %s169
      %p178 = scmp.eq.s32.totalorder %s29, 0
      %p179 = por %p177, %p178
      %p180 = scmp.ne.s32.totalorder %s168, %s169
      %p181 = scmp.eq.s32.totalorder %s30, 1
      %p182 = por %p180, %p181
      %p184 = scmp.ne.s32.totalorder %s169, %s183
      %p185 = scmp.eq.s32.totalorder %s30, 0
      %p186 = por %p184, %p185
      %s188 = sadd.s32 %s187, 1
      %p191 = scmp.eq.s32.totalorder %s24, 1
      %p192 = scmp.ne.s32.totalorder %s187, %s189
      %p193 = scmp.eq.s32.totalorder %s24, 0
      %p194 = por %p192, %p193
      %p195 = scmp.ne.s32.totalorder %s187, %s189
      %p196 = scmp.eq.s32.totalorder %s29, 1
      %p197 = por %p195, %p196
      %p198 = scmp.ne.s32.totalorder %s189, %s190
      %p199 = scmp.eq.s32.totalorder %s29, 0
      %p200 = por %p198, %p199
      %p201 = scmp.ne.s32.totalorder %s189, %s190
      %p202 = scmp.eq.s32.totalorder %s30, 1
      %p203 = por %p201, %p202
      %p205 = scmp.ne.s32.totalorder %s190, %s204
      %p206 = scmp.eq.s32.totalorder %s30, 0
      %p207 = por %p205, %p206
      %s209 = sadd.s32 %s208, 1
      %p212 = scmp.eq.s32.totalorder %s24, 1
      %p213 = scmp.ne.s32.totalorder %s208, %s210
      %p214 = scmp.eq.s32.totalorder %s24, 0
      %p215 = por %p213, %p214
      %p216 = scmp.ne.s32.totalorder %s208, %s210
      %p217 = scmp.eq.s32.totalorder %s29, 1
      %p218 = por %p216, %p217
      %p219 = scmp.ne.s32.totalorder %s210, %s211
      %p220 = scmp.eq.s32.totalorder %s29, 0
      %p221 = por %p219, %p220
      %p222 = scmp.ne.s32.totalorder %s210, %s211
      %p223 = scmp.eq.s32.totalorder %s30, 1
      %p224 = por %p222, %p223
      %p226 = scmp.ne.s32.totalorder %s211, %s225
      %p227 = scmp.eq.s32.totalorder %s30, 0
      %p228 = por %p226, %p227
      %s230 = sadd.s32 %s229, 1
      %p233 = scmp.eq.s32.totalorder %s24, 1
      %p234 = scmp.ne.s32.totalorder %s229, %s231
      %p235 = scmp.eq.s32.totalorder %s24, 0
      %p236 = por %p234, %p235
      %p237 = scmp.ne.s32.totalorder %s229, %s231
      %p238 = scmp.eq.s32.totalorder %s29, 1
      %p239 = por %p237, %p238
      %p240 = scmp.ne.s32.totalorder %s231, %s232
      %p241 = scmp.eq.s32.totalorder %s29, 0
      %p242 = por %p240, %p241
      %p243 = scmp.ne.s32.totalorder %s231, %s232
      %p244 = scmp.eq.s32.totalorder %s30, 1
      %p245 = por %p243, %p244
      %p247 = scmp.ne.s32.totalorder %s232, %s246
      %p248 = scmp.eq.s32.totalorder %s30, 0
      %p249 = por %p247, %p248
      %s251 = sadd.s32 %s250, 1
      %p254 = scmp.eq.s32.totalorder %s24, 1
      %p255 = scmp.ne.s32.totalorder %s250, %s252
      %p256 = scmp.eq.s32.totalorder %s24, 0
      %p257 = por %p255, %p256
      %p258 = scmp.ne.s32.totalorder %s250, %s252
      %p259 = scmp.eq.s32.totalorder %s29, 1
      %p260 = por %p258, %p259
      %p261 = scmp.ne.s32.totalorder %s252, %s253
      %p262 = scmp.eq.s32.totalorder %s29, 0
      %p263 = por %p261, %p262
      %p264 = scmp.ne.s32.totalorder %s252, %s253
      %p265 = scmp.eq.s32.totalorder %s30, 1
      %p266 = por %p264, %p265
      %p268 = scmp.ne.s32.totalorder %s253, %s267
      %p269 = scmp.eq.s32.totalorder %s30, 0
      %p270 = por %p268, %p269
      %s271 = ssub.s32 %s32, %s39
      %p272 = scmp.eq.s32.totalorder %s271, 0
      %s274 = sadd.s32 %s273, 1
      %s275 = scalar_select %p272, %s273, %s274
      %p278 = pneg %p272
      %p279 = scmp.eq.s32.totalorder %s24, 1
      %p280 = por %p278, %p279
      %p281 = scmp.ne.s32.totalorder %s273, %s276
      %p282 = scmp.eq.s32.totalorder %s24, 0
      %p283 = por %p281, %p282
      %p284 = scmp.ne.s32.totalorder %s273, %s276
      %p285 = scmp.eq.s32.totalorder %s29, 1
      %p286 = por %p284, %p285
      %p287 = scmp.ne.s32.totalorder %s276, %s277
      %p288 = scmp.eq.s32.totalorder %s29, 0
      %p289 = por %p287, %p288
      %p290 = scmp.ne.s32.totalorder %s276, %s277
      %p291 = scmp.eq.s32.totalorder %s30, 1
      %p292 = por %p290, %p291
      %p294 = scmp.ne.s32.totalorder %s277, %s293
      %p295 = scmp.eq.s32.totalorder %s30, 0
      %p296 = por %p294, %p295
      %s298 = sadd.s32 %s297, 1
      %p301 = scmp.eq.s32.totalorder %s24, 1
      %p302 = scmp.ne.s32.totalorder %s297, %s299
      %p303 = scmp.eq.s32.totalorder %s24, 0
      %p304 = por %p302, %p303
      %p305 = scmp.ne.s32.totalorder %s297, %s299
      %p306 = scmp.eq.s32.totalorder %s29, 1
      %p307 = por %p305, %p306
      %p308 = scmp.ne.s32.totalorder %s299, %s300
      %p309 = scmp.eq.s32.totalorder %s29, 0
      %p310 = por %p308, %p309
      %p311 = scmp.ne.s32.totalorder %s299, %s300
      %p312 = scmp.eq.s32.totalorder %s30, 1
      %p313 = por %p311, %p312
      %p315 = scmp.ne.s32.totalorder %s300, %s314
      %p316 = scmp.eq.s32.totalorder %s30, 0
      %p317 = por %p315, %p316
      %s318 = ssub.s32 %s31, %s43
      %s319 = ssub.s32 %s32, %s39
      %s320 = sor.u32 %s318, %s319
      %p321 = scmp.eq.s32.totalorder %s320, 0
      %s323 = sadd.s32 %s322, 1
      %s324 = scalar_select %p321, %s322, %s323
      %p327 = pneg %p321
      %p328 = scmp.eq.s32.totalorder %s24, 1
      %p329 = por %p327, %p328
      %p330 = scmp.ne.s32.totalorder %s322, %s325
      %p331 = scmp.eq.s32.totalorder %s24, 0
      %p332 = por %p330, %p331
      %p333 = scmp.ne.s32.totalorder %s322, %s325
      %p334 = scmp.eq.s32.totalorder %s29, 1
      %p335 = por %p333, %p334
      %p336 = scmp.ne.s32.totalorder %s325, %s326
      %p337 = scmp.eq.s32.totalorder %s29, 0
      %p338 = por %p336, %p337
      %p339 = scmp.ne.s32.totalorder %s325, %s326
      %p340 = scmp.eq.s32.totalorder %s30, 1
      %p341 = por %p339, %p340
      %p343 = scmp.ne.s32.totalorder %s326, %s342
      %p344 = scmp.eq.s32.totalorder %s30, 0
      %p345 = por %p343, %p344
      %p346 = scmp.le.s32.totalorder 1, %s24
      %p347 = scmp.lt.s32.totalorder %s24, 3
      %p348 = pnand %p346, %p347
      %p349 = pneg %p348
      // Predicated region
      $region9: #{tpu_custom_call.1} parent=5 // pred_check
        _
      $region10: #{tpu_custom_call.1} parent=5 // pred_check_branch
        %351 = sbr.rel (%p348) target = $region12
      $region11: #{tpu_custom_call.1} parent=5 // pred_region
        %s352 = ssub.s32 %s24, 1
        // Predicated region
        $region13: #{tpu_custom_call.1} parent=11 // pred_check
          %p353 = pneg %p137
        $region14: #{tpu_custom_call.1} parent=11 // pred_check_branch
          %355 = sbr.rel (%p353) target = $region16
        $region15: #{tpu_custom_call.1} parent=11 // pred_region
          %s357 = ssub.s32 64, 64
          %358 = vsyncadd [#allocation6], %s357
          %s360 = sshll.u32 [#allocation5], 4
          %s361 = int_to_ptr.vmem [resolvable:$true] %s360
          %363 = dma.hbm_to_vmem [thread:$0]  %s3, 64, %s361, [#allocation6]
        $region16: #{tpu_custom_call.1} parent=11 // pred_fallthru
          _
        // Predicated region
        $region17: #{tpu_custom_call.1} parent=11 // pred_check
          %p364 = pneg %p158
        $region18: #{tpu_custom_call.1} parent=11 // pred_check_branch
          %366 = sbr.rel (%p364) target = $region20
        $region19: #{tpu_custom_call.1} parent=11 // pred_region
          %s368 = ssub.s32 64, 64
          %369 = vsyncadd [#allocation9], %s368
          %s371 = sshll.u32 [#allocation8], 4
          %s372 = int_to_ptr.vmem [resolvable:$true] %s371
          %374 = dma.hbm_to_vmem [thread:$0]  %s4, 64, %s372, [#allocation9]
        $region20: #{tpu_custom_call.1} parent=11 // pred_fallthru
          _
        // Predicated region
        $region21: #{tpu_custom_call.1} parent=11 // pred_check
          %p375 = pneg %p179
        $region22: #{tpu_custom_call.1} parent=11 // pred_check_branch
          %377 = sbr.rel (%p375) target = $region24
        $region23: #{tpu_custom_call.1} parent=11 // pred_region
          _
        $region24: #{tpu_custom_call.1} parent=11 // pred_fallthru
          _
        // Predicated region
        $region25: #{tpu_custom_call.1} parent=11 // pred_check
          %p378 = pneg %p200
        $region26: #{tpu_custom_call.1} parent=11 // pred_check_branch
          %380 = sbr.rel (%p378) target = $region28
        $region27: #{tpu_custom_call.1} parent=11 // pred_region
          _
        $region28: #{tpu_custom_call.1} parent=11 // pred_fallthru
          _
        // Predicated region
        $region29: #{tpu_custom_call.1} parent=11 // pred_check
          %p381 = pneg %p221
        $region30: #{tpu_custom_call.1} parent=11 // pred_check_branch
          %383 = sbr.rel (%p381) target = $region32
        $region31: #{tpu_custom_call.1} parent=11 // pred_region
          _
        $region32: #{tpu_custom_call.1} parent=11 // pred_fallthru
          _
        // Predicated region
        $region33: #{tpu_custom_call.1} parent=11 // pred_check
          %p384 = pneg %p242
        $region34: #{tpu_custom_call.1} parent=11 // pred_check_branch
          %386 = sbr.rel (%p384) target = $region36
        $region35: #{tpu_custom_call.1} parent=11 // pred_region
          %s388 = ssub.s32 64, 64
          %389 = vsyncadd [#allocation9], %s388
          %s391 = sshll.u32 [#allocation10], 4
          %s392 = int_to_ptr.vmem [resolvable:$true] %s391
          %394 = dma.hbm_to_vmem [thread:$0]  %s8, 64, %s392, [#allocation9]
        $region36: #{tpu_custom_call.1} parent=11 // pred_fallthru
          _
        // Predicated region
        $region37: #{tpu_custom_call.1} parent=11 // pred_check
          %p395 = pneg %p263
        $region38: #{tpu_custom_call.1} parent=11 // pred_check_branch
          %397 = sbr.rel (%p395) target = $region40
        $region39: #{tpu_custom_call.1} parent=11 // pred_region
          _
        $region40: #{tpu_custom_call.1} parent=11 // pred_fallthru
          _
        // Predicated region
        $region41: #{tpu_custom_call.1} parent=11 // pred_check
          %p398 = pneg %p289
        $region42: #{tpu_custom_call.1} parent=11 // pred_check_branch
          %400 = sbr.rel (%p398) target = $region44
        $region43: #{tpu_custom_call.1} parent=11 // pred_region
          %s401 = smul.u32 2, %s34
          %p402 = scmp.lt.s32.totalorder %s401, 1
          %s403 = scalar_select %p402, %s401, 1
          %s404 = smul.addr %s403, 8
          %s405 = scalar_lea.vmem %s10, %s404
          %s406 = smul.u32 2, %s34
        $region44: #{tpu_custom_call.1} parent=11 // pred_fallthru
          _
        // Predicated region
        $region45: #{tpu_custom_call.1} parent=11 // pred_check
          %p407 = pneg %p310
        $region46: #{tpu_custom_call.1} parent=11 // pred_check_branch
          %409 = sbr.rel (%p407) target = $region48
        $region47: #{tpu_custom_call.1} parent=11 // pred_region
          _
        $region48: #{tpu_custom_call.1} parent=11 // pred_fallthru
          _
      $region12: #{tpu_custom_call.1} parent=5 // pred_fallthru
        _
      %p410 = scmp.lt.s32.totalorder %s24, 2
      // Predicated region
      $region49: #{tpu_custom_call.1} parent=5 // pred_check
        %p411 = pneg %p410
      $region50: #{tpu_custom_call.1} parent=5 // pred_check_branch
        %413 = sbr.rel (%p411) target = $region52
      $region51: #{tpu_custom_call.1} parent=5 // pred_region
        // Predicated region
        $region53: #{tpu_custom_call.1} parent=51 // pred_check
          %p414 = pneg %p56
        $region54: #{tpu_custom_call.1} parent=51 // pred_check_branch
          %416 = sbr.rel (%p414) target = $region56
        $region55: #{tpu_custom_call.1} parent=51 // pred_region
          %p417 = scmp.lt.s32.totalorder %s31, 1
          %s418 = scalar_select %p417, %s31, 1
          %s419 = smul.addr %s418, 8
          %s420 = scalar_lea.vmem %s0, %s419
        $region56: #{tpu_custom_call.1} parent=51 // pred_fallthru
          _
        // Predicated region
        $region57: #{tpu_custom_call.1} parent=51 // pred_check
          %p421 = pneg %p82
        $region58: #{tpu_custom_call.1} parent=51 // pred_check_branch
          %423 = sbr.rel (%p421) target = $region60
        $region59: #{tpu_custom_call.1} parent=51 // pred_region
          %p424 = scmp.lt.s32.totalorder %s31, 1
          %s425 = scalar_select %p424, %s31, 1
          %s426 = smul.addr %s425, 8
          %s427 = scalar_lea.vmem %s1, %s426
        $region60: #{tpu_custom_call.1} parent=51 // pred_fallthru
          _
        // Predicated region
        $region61: #{tpu_custom_call.1} parent=51 // pred_check
          %p428 = pneg %p110
        $region62: #{tpu_custom_call.1} parent=51 // pred_check_branch
          %430 = sbr.rel (%p428) target = $region64
        $region63: #{tpu_custom_call.1} parent=51 // pred_region
          %s431 = smul.u32 2, %s32
          %p432 = scmp.lt.s32.totalorder %s31, 1
          %s433 = scalar_select %p432, %s31, 1
          %p434 = scmp.lt.s32.totalorder %s431, 1
          %s435 = scalar_select %p434, %s431, 1
          %s436 = smul.addr %s433, 2
          %s437 = sadd.s32 %s435, %s436
          %s438 = smul.addr %s437, 4
          %s439 = scalar_lea.vmem %s2, %s438
          %s440 = smul.u32 2, %s32
        $region64: #{tpu_custom_call.1} parent=51 // pred_fallthru
          _
      $region52: #{tpu_custom_call.1} parent=5 // pred_fallthru
        _
      %p441 = scmp.le.s32.totalorder 1, %s24
      %p442 = scmp.lt.s32.totalorder %s24, 3
      %p443 = pnand %p441, %p442
      %p444 = pneg %p443
      // Predicated region
      $region65: #{tpu_custom_call.1} parent=5 // pred_check
        _
      $region66: #{tpu_custom_call.1} parent=5 // pred_check_branch
        %446 = sbr.rel (%p443) target = $region68
      $region67: #{tpu_custom_call.1} parent=5 // pred_region
        %s447 = ssub.s32 %s24, 1
        // Predicated region
        $region69: #{tpu_custom_call.1} parent=67 // pred_check
          %p448 = pneg %p137
        $region70: #{tpu_custom_call.1} parent=67 // pred_check_branch
          %450 = sbr.rel (%p448) target = $region72
        $region71: #{tpu_custom_call.1} parent=67 // pred_region
          %451 = dma.done [#allocation6], 64
        $region72: #{tpu_custom_call.1} parent=67 // pred_fallthru
          _
        // Predicated region
        $region73: #{tpu_custom_call.1} parent=67 // pred_check
          %p452 = pneg %p158
        $region74: #{tpu_custom_call.1} parent=67 // pred_check_branch
          %454 = sbr.rel (%p452) target = $region76
        $region75: #{tpu_custom_call.1} parent=67 // pred_region
          %455 = dma.done [#allocation9], 64
        $region76: #{tpu_custom_call.1} parent=67 // pred_fallthru
          _
        // Predicated region
        $region77: #{tpu_custom_call.1} parent=67 // pred_check
          %p456 = pneg %p242
        $region78: #{tpu_custom_call.1} parent=67 // pred_check_branch
          %458 = sbr.rel (%p456) target = $region80
        $region79: #{tpu_custom_call.1} parent=67 // pred_region
          %459 = dma.done [#allocation9], 64
        $region80: #{tpu_custom_call.1} parent=67 // pred_fallthru
          _
        %p460 = scmp.lt.s32.totalorder %s33, 1
        %s461 = scalar_select %p460, %s33, 1
        %s462 = smul.addr %s461, 8
        %s463 = scalar_lea.vmem %s0, %s462
        %p464 = pneg %p62
        %p465 = pneg %p59
        %p466 = scmp.lt.s32.totalorder %s33, 1
        %s467 = scalar_select %p466, %s33, 1
        %s468 = smul.addr %s467, 8
        %s469 = scalar_lea.vmem %s1, %s468
        %p470 = pneg %p88
        %p471 = pneg %p85
        %s472 = smul.u32 2, %s34
        %p473 = scmp.lt.s32.totalorder %s33, 1
        %s474 = scalar_select %p473, %s33, 1
        %p475 = scmp.lt.s32.totalorder %s472, 1
        %s476 = scalar_select %p475, %s472, 1
        %s477 = smul.addr %s474, 2
        %s478 = sadd.s32 %s476, %s477
        %s479 = smul.addr %s478, 4
        %s480 = scalar_lea.vmem %s2, %s479
        %p481 = pneg %p116
        %p482 = pneg %p113
        %p483 = pneg %p137
        %p484 = pneg %p134
        %p485 = pneg %p158
        %p486 = pneg %p155
        %p487 = pneg %p179
        %p488 = pneg %p176
        %p489 = pneg %p200
        %p490 = pneg %p197
        %p491 = pneg %p221
        %p492 = pneg %p218
        %p493 = pneg %p242
        %p494 = pneg %p239
        %p495 = pneg %p263
        %p496 = pneg %p260
        %s497 = smul.u32 2, %s34
        %p498 = scmp.lt.s32.totalorder %s497, 1
        %s499 = scalar_select %p498, %s497, 1
        %s500 = smul.addr %s499, 8
        %s501 = scalar_lea.vmem %s10, %s500
        %p502 = pneg %p289
        %p503 = pneg %p286
        %p504 = pneg %p310
        %p505 = pneg %p307
        %p506 = pneg %p338
        %p507 = pneg %p335
        %s508 = sand.u32 %s325, 1
        %s509 = scalar_lea.sflag [#allocation7], %s508
        %s510 = sand.u32 %s325, 1
        %s511 = smul.addr %s510, 16
        %s512 = scalar_lea.vmem [#allocation11], %s511
        %p513 = scmp.lt.s32.totalorder %s33, 1
        %s514 = scalar_select %p513, %s33, 1
        %s515 = smul.addr %s514, 8
        %s516 = scalar_lea.vmem %s0, %s515
        %p517 = scmp.lt.s32.totalorder %s33, 1
        %s518 = scalar_select %p517, %s33, 1
        %s519 = smul.addr %s518, 8
        %s520 = scalar_lea.vmem %s1, %s519
        %s521 = smul.u32 2, %s34
        %p522 = scmp.lt.s32.totalorder %s33, 1
        %s523 = scalar_select %p522, %s33, 1
        %p524 = scmp.lt.s32.totalorder %s521, 1
        %s525 = scalar_select %p524, %s521, 1
        %s526 = smul.addr %s523, 2
        %s527 = sadd.s32 %s525, %s526
        %s528 = smul.addr %s527, 4
        %s529 = scalar_lea.vmem %s2, %s528
        %s530 = smul.u32 2, %s34
        %s531 = smul.u32 2, %s34
        %p532 = scmp.lt.s32.totalorder %s531, 1
        %s533 = scalar_select %p532, %s531, 1
        %s534 = smul.addr %s533, 8
        %s535 = scalar_lea.vmem %s10, %s534
        %s536 = smul.u32 2, %s34
        %s537 = smul.u32 2, %s34
        %p539 = scmp.eq.s32.totalorder %s34, 0
        // Predicated region
        $region81: #{tpu_custom_call.1} parent=67 // pred_check
          %p540 = pneg %p539
        $region82: #{tpu_custom_call.1} parent=67 // pred_check_branch
          %542 = sbr.rel (%p540) target = $region84
        $region83: #{tpu_custom_call.1} parent=67 // pred_region
          %v543 = vld [vmem:[#allocation5] sm:$0xf]
          %v544 = vld [vmem:[%s516] sm:$0xff]
          %v545 = vld [vmem:[#allocation8] sm:$0xf]
          %v546 = vld [vmem:[%s520] sm:$0xff]
          %vm547 = vcmask 64512
          %v549 = vsel %vm547, %v545, 0
          %551 = vmatprep.subr.mxu0 0.0
          %552 = vmatpush1.msra.mxu0 0.0
          %553 = vmatprep.subr.mxu0 0.0
          %554 = vmatpush1.msra.mxu0 0.0
          %555 = vmatprep.subr.mxu0 0.0
          %556 = vmatpush1.msra.mxu0 0.0
          %557 = vmatprep.subr.mxu0 0.0
          %558 = vmatpush1.msra.mxu0 0.0
          %559 = vmatprep.subr.mxu0 0.0
          %560 = vmatpush1.msra.mxu0 0.0
          %561 = vmatprep.subr.mxu0 0.0
          %562 = vmatpush1.msra.mxu0 0.0
          %563 = vmatprep.subr.mxu0 0.0
          %564 = vmatpush1.msra.mxu0 0.0
          %565 = vmatprep.subr.mxu0 0.0
          %566 = vmatpush1.msra.mxu0 0.0
          %567 = vmatprep.subr.mxu0 0.0
          %568 = vmatpush1.msra.mxu0 0.0
          %569 = vmatprep.subr.mxu0 0.0
          %570 = vmatpush1.msra.mxu0 0.0
          %571 = vmatprep.subr.mxu0 0.0
          %572 = vmatpush1.msra.mxu0 0.0
          %573 = vmatprep.subr.mxu0 0.0
          %574 = vmatpush1.msra.mxu0 0.0
          %575 = vmatprep.subr.mxu0 0.0
          %576 = vmatpush1.msra.mxu0 0.0
          %577 = vmatprep.subr.mxu0 0.0
          %578 = vmatpush1.msra.mxu0 0.0
          %579 = vmatprep.subr.mxu0 0.0
          %580 = vmatpush1.msra.mxu0 0.0
          %581 = vmatprep.subr.mxu0 0.0
          %582 = vmatpush1.msra.mxu0 %v546
          %583 = vmatprep.subr.mxu0 0.0
          %584 = vmatpush2.msra.mxu0 0.0
          %585 = vmatprep.subr.mxu0 0.0
          %586 = vmatpush2.msra.mxu0 0.0
          %587 = vmatprep.subr.mxu0 0.0
          %588 = vmatpush2.msra.mxu0 0.0
          %589 = vmatprep.subr.mxu0 0.0
          %590 = vmatpush2.msra.mxu0 0.0
          %591 = vmatprep.subr.mxu0 0.0
          %592 = vmatpush2.msra.mxu0 0.0
          %593 = vmatprep.subr.mxu0 0.0
          %594 = vmatpush2.msra.mxu0 0.0
          %595 = vmatprep.subr.mxu0 0.0
          %596 = vmatpush2.msra.mxu0 0.0
          %597 = vmatprep.subr.mxu0 0.0
          %598 = vmatpush2.msra.mxu0 0.0
          %599 = vmatprep.subr.mxu0 0.0
          %600 = vmatpush2.msra.mxu0 0.0
          %601 = vmatprep.subr.mxu0 0.0
          %602 = vmatpush2.msra.mxu0 0.0
          %603 = vmatprep.subr.mxu0 0.0
          %604 = vmatpush2.msra.mxu0 0.0
          %605 = vmatprep.subr.mxu0 0.0
          %606 = vmatpush2.msra.mxu0 0.0
          %607 = vmatprep.subr.mxu0 0.0
          %608 = vmatpush2.msra.mxu0 0.0
          %609 = vmatprep.subr.mxu0 0.0
          %610 = vmatpush2.msra.mxu0 0.0
          %611 = vmatprep.subr.mxu0 0.0
          %612 = vmatpush2.msra.mxu0 0.0
          %613 = vmatprep.subr.mxu0 0.0
          %614 = vmatpush2.msra.mxu0 0.0
          %615 = vmatprep.mubr.f32.mxu0 0.0
          %616 = vmatmul.mubr.f32.gmra.mxu0 %v549
          %v617 = vpop.f32.mrf.mxu0
          %v618 = vadd.f32 0.0, %v617
          %v619 = vpop.f32.mrf.mxu0
          %620 = vdwg.mxu0
          %v622 = vsel %vm547, %v543, 0
          %624 = vmatprep.subr.mxu0 0.0
          %625 = vmatpush1.msra.mxu0 0.0
          %626 = vmatprep.subr.mxu0 0.0
          %627 = vmatpush1.msra.mxu0 0.0
          %628 = vmatprep.subr.mxu0 0.0
          %629 = vmatpush1.msra.mxu0 0.0
          %630 = vmatprep.subr.mxu0 0.0
          %631 = vmatpush1.msra.mxu0 0.0
          %632 = vmatprep.subr.mxu0 0.0
          %633 = vmatpush1.msra.mxu0 0.0
          %634 = vmatprep.subr.mxu0 0.0
          %635 = vmatpush1.msra.mxu0 0.0
          %636 = vmatprep.subr.mxu0 0.0
          %637 = vmatpush1.msra.mxu0 0.0
          %638 = vmatprep.subr.mxu0 0.0
          %639 = vmatpush1.msra.mxu0 0.0
          %640 = vmatprep.subr.mxu0 0.0
          %641 = vmatpush1.msra.mxu0 0.0
          %642 = vmatprep.subr.mxu0 0.0
          %643 = vmatpush1.msra.mxu0 0.0
          %644 = vmatprep.subr.mxu0 0.0
          %645 = vmatpush1.msra.mxu0 0.0
          %646 = vmatprep.subr.mxu0 0.0
          %647 = vmatpush1.msra.mxu0 0.0
          %648 = vmatprep.subr.mxu0 0.0
          %649 = vmatpush1.msra.mxu0 0.0
          %650 = vmatprep.subr.mxu0 0.0
          %651 = vmatpush1.msra.mxu0 0.0
          %652 = vmatprep.subr.mxu0 0.0
          %653 = vmatpush1.msra.mxu0 0.0
          %654 = vmatprep.subr.mxu0 0.0
          %655 = vmatpush1.msra.mxu0 %v544
          %656 = vmatprep.subr.mxu0 0.0
          %657 = vmatpush2.msra.mxu0 0.0
          %658 = vmatprep.subr.mxu0 0.0
          %659 = vmatpush2.msra.mxu0 0.0
          %660 = vmatprep.subr.mxu0 0.0
          %661 = vmatpush2.msra.mxu0 0.0
          %662 = vmatprep.subr.mxu0 0.0
          %663 = vmatpush2.msra.mxu0 0.0
          %664 = vmatprep.subr.mxu0 0.0
          %665 = vmatpush2.msra.mxu0 0.0
          %666 = vmatprep.subr.mxu0 0.0
          %667 = vmatpush2.msra.mxu0 0.0
          %668 = vmatprep.subr.mxu0 0.0
          %669 = vmatpush2.msra.mxu0 0.0
          %670 = vmatprep.subr.mxu0 0.0
          %671 = vmatpush2.msra.mxu0 0.0
          %672 = vmatprep.subr.mxu0 0.0
          %673 = vmatpush2.msra.mxu0 0.0
          %674 = vmatprep.subr.mxu0 0.0
          %675 = vmatpush2.msra.mxu0 0.0
          %676 = vmatprep.subr.mxu0 0.0
          %677 = vmatpush2.msra.mxu0 0.0
          %678 = vmatprep.subr.mxu0 0.0
          %679 = vmatpush2.msra.mxu0 0.0
          %680 = vmatprep.subr.mxu0 0.0
          %681 = vmatpush2.msra.mxu0 0.0
          %682 = vmatprep.subr.mxu0 0.0
          %683 = vmatpush2.msra.mxu0 0.0
          %684 = vmatprep.subr.mxu0 0.0
          %685 = vmatpush2.msra.mxu0 0.0
          %686 = vmatprep.subr.mxu0 0.0
          %687 = vmatpush2.msra.mxu0 0.0
          %688 = vmatprep.mubr.f32.mxu0 0.0
          %689 = vmatmul.mubr.f32.gmra.mxu0 %v622
          %v690 = vpop.f32.mrf.mxu0
          %v691 = vadd.f32 %v618, %v690
          %v692 = vpop.f32.mrf.mxu0
          %693 = vdwg.mxu0
          %v694 = vld [vmem:[%s5] sm:$0xf]
          %696 = vset.pattern.permute.xlu0 0
          %697 = vperm.xlu0 %696, %v694
          %v698 = vpop.permute.xlu0 %697
          %v700 = vadd.f32 %v691, %v698
          %v701 = vmax.f32 %v700, 0.0
          %v702 = vld [vmem:[%s6] sm:$0xf]
          %704 = vset.pattern.permute.xlu0 0
          %705 = vperm.xlu0 %704, %v702
          %v706 = vpop.permute.xlu0 %705
          %v708 = vmul.f32 %v701, %v706
          %vm709 = vcmask 519168
          %v710 = vsel %vm709, %v708, 0.0
          %v711 = vrot.slane %v710, 4
          %v712 = vadd.f32 %v710, %v711
          %v713 = vrot.slane %v712, 2
          %v714 = vadd.f32 %v712, %v713
          %v715 = vrot.slane %v714, 1
          %v716 = vadd.f32 %v714, %v715
          %s717 = sld [smem:[#allocation4]]
          %v718 = vstv %s717
          %v719 = vadd.f32 %v716, %v718
          %v720 = vxor.u32 %v719, 2147483648
          %v721 = vmul.f32 %v720, 1.442695
          %v722 = vpow.pop %v721
          %v723 = vadd.f32 %v722, 1.0
          %v724 = vrcp.pop %v723
          %v725 = vmul.f32 1.0, %v724
          %vm726 = vcmask 57344
          %727 = vst.msk [vmem:[#allocation2] sm:$0x1] %vm726, %v725
          %729 = vrot.lane.b32.xlu0 %v725, 120
          %v730 = vpop.permute.xlu0 %729
          %732 = vst.msk [vmem:[#allocation2 + $0x1] sm:$0x1] %vm726, %v730
          %733 = vrot.lane.b32.xlu0 %v725, 112
          %v734 = vpop.permute.xlu0 %733
          %736 = vst.msk [vmem:[#allocation2 + $0x2] sm:$0x1] %vm726, %v734
          %737 = vrot.lane.b32.xlu0 %v725, 104
          %v738 = vpop.permute.xlu0 %737
          %740 = vst.msk [vmem:[#allocation2 + $0x3] sm:$0x1] %vm726, %v738
          %741 = vrot.lane.b32.xlu0 %v725, 96
          %v742 = vpop.permute.xlu0 %741
          %744 = vst.msk [vmem:[#allocation2 + $0x4] sm:$0x1] %vm726, %v742
          %745 = vrot.lane.b32.xlu0 %v725, 88
          %v746 = vpop.permute.xlu0 %745
          %748 = vst.msk [vmem:[#allocation2 + $0x5] sm:$0x1] %vm726, %v746
          %749 = vrot.lane.b32.xlu0 %v725, 80
          %v750 = vpop.permute.xlu0 %749
          %752 = vst.msk [vmem:[#allocation2 + $0x6] sm:$0x1] %vm726, %v750
          %753 = vrot.lane.b32.xlu0 %v725, 72
          %v754 = vpop.permute.xlu0 %753
          %756 = vst.msk [vmem:[#allocation2 + $0x7] sm:$0x1] %vm726, %v754
        $region84: #{tpu_custom_call.1} parent=67 // pred_fallthru
          _
        %v757 = vld [vmem:[%s535] sm:$0xff]
        %v758 = vld [vmem:[%s535 + $0x8] sm:$0xff]
        %v759 = vld [vmem:[#allocation2] sm:$0xff]
        %vm760 = vcmask 64512
        %v762 = vsel %vm760, %v757, 0
        %v765 = vsel %vm760, %v758, 0
        %767 = vmatprep.subr.mxu0 0.0
        %768 = vmatpush1.msra.mxu0 0.0
        %769 = vmatprep.subr.mxu0 0.0
        %770 = vmatpush1.msra.mxu0 0.0
        %771 = vmatprep.subr.mxu0 0.0
        %772 = vmatpush1.msra.mxu0 0.0
        %773 = vmatprep.subr.mxu0 0.0
        %774 = vmatpush1.msra.mxu0 0.0
        %775 = vmatprep.subr.mxu0 0.0
        %776 = vmatpush1.msra.mxu0 0.0
        %777 = vmatprep.subr.mxu0 0.0
        %778 = vmatpush1.msra.mxu0 0.0
        %779 = vmatprep.subr.mxu0 0.0
        %780 = vmatpush1.msra.mxu0 0.0
        %781 = vmatprep.subr.mxu0 0.0
        %782 = vmatpush1.msra.mxu0 0.0
        %783 = vmatprep.subr.mxu0 0.0
        %784 = vmatpush1.msra.mxu0 0.0
        %785 = vmatprep.subr.mxu0 0.0
        %786 = vmatpush1.msra.mxu0 0.0
        %787 = vmatprep.subr.mxu0 0.0
        %788 = vmatpush1.msra.mxu0 0.0
        %789 = vmatprep.subr.mxu0 0.0
        %790 = vmatpush1.msra.mxu0 0.0
        %791 = vmatprep.subr.mxu0 0.0
        %792 = vmatpush1.msra.mxu0 0.0
        %793 = vmatprep.subr.mxu0 0.0
        %794 = vmatpush1.msra.mxu0 0.0
        %795 = vmatprep.subr.mxu0 0.0
        %796 = vmatpush1.msra.mxu0 0.0
        %797 = vmatprep.subr.mxu0 0.0
        %798 = vmatpush1.msra.mxu0 %v759
        %799 = vmatprep.subr.mxu0 0.0
        %800 = vmatpush2.msra.mxu0 0.0
        %801 = vmatprep.subr.mxu0 0.0
        %802 = vmatpush2.msra.mxu0 0.0
        %803 = vmatprep.subr.mxu0 0.0
        %804 = vmatpush2.msra.mxu0 0.0
        %805 = vmatprep.subr.mxu0 0.0
        %806 = vmatpush2.msra.mxu0 0.0
        %807 = vmatprep.subr.mxu0 0.0
        %808 = vmatpush2.msra.mxu0 0.0
        %809 = vmatprep.subr.mxu0 0.0
        %810 = vmatpush2.msra.mxu0 0.0
        %811 = vmatprep.subr.mxu0 0.0
        %812 = vmatpush2.msra.mxu0 0.0
        %813 = vmatprep.subr.mxu0 0.0
        %814 = vmatpush2.msra.mxu0 0.0
        %815 = vmatprep.subr.mxu0 0.0
        %816 = vmatpush2.msra.mxu0 0.0
        %817 = vmatprep.subr.mxu0 0.0
        %818 = vmatpush2.msra.mxu0 0.0
        %819 = vmatprep.subr.mxu0 0.0
        %820 = vmatpush2.msra.mxu0 0.0
        %821 = vmatprep.subr.mxu0 0.0
        %822 = vmatpush2.msra.mxu0 0.0
        %823 = vmatprep.subr.mxu0 0.0
        %824 = vmatpush2.msra.mxu0 0.0
        %825 = vmatprep.subr.mxu0 0.0
        %826 = vmatpush2.msra.mxu0 0.0
        %827 = vmatprep.subr.mxu0 0.0
        %828 = vmatpush2.msra.mxu0 0.0
        %829 = vmatprep.subr.mxu0 0.0
        %830 = vmatpush2.msra.mxu0 0.0
        %831 = vmatprep.mubr.f32.mxu0 0.0
        %832 = vmatmul.mubr.f32.gmra.mxu0 %v762
        %v833 = vpop.f32.mrf.mxu0
        %v834 = vadd.f32 0.0, %v833
        %v835 = vpop.f32.mrf.mxu0
        %836 = vmatprep.mubr.f32.mxu0 0.0
        %837 = vmatmul.mubr.f32.gmra.mxu0 %v765
        %v838 = vpop.f32.mrf.mxu0
        %v839 = vadd.f32 0.0, %v838
        %v840 = vpop.f32.mrf.mxu0
        %841 = vdwg.mxu0
        %v842 = vld [vmem:[%s11] sm:$0xff]
        %v844 = vsel %vm760, %v834, 0
        %v847 = vsel %vm760, %v839, 0
        %849 = vmatprep.subr.mxu0 0.0
        %850 = vmatpush1.msra.mxu0 0.0
        %851 = vmatprep.subr.mxu0 0.0
        %852 = vmatpush1.msra.mxu0 0.0
        %853 = vmatprep.subr.mxu0 0.0
        %854 = vmatpush1.msra.mxu0 0.0
        %855 = vmatprep.subr.mxu0 0.0
        %856 = vmatpush1.msra.mxu0 0.0
        %857 = vmatprep.subr.mxu0 0.0
        %858 = vmatpush1.msra.mxu0 0.0
        %859 = vmatprep.subr.mxu0 0.0
        %860 = vmatpush1.msra.mxu0 0.0
        %861 = vmatprep.subr.mxu0 0.0
        %862 = vmatpush1.msra.mxu0 0.0
        %863 = vmatprep.subr.mxu0 0.0
        %864 = vmatpush1.msra.mxu0 0.0
        %865 = vmatprep.subr.mxu0 0.0
        %866 = vmatpush1.msra.mxu0 0.0
        %867 = vmatprep.subr.mxu0 0.0
        %868 = vmatpush1.msra.mxu0 0.0
        %869 = vmatprep.subr.mxu0 0.0
        %870 = vmatpush1.msra.mxu0 0.0
        %871 = vmatprep.subr.mxu0 0.0
        %872 = vmatpush1.msra.mxu0 0.0
        %873 = vmatprep.subr.mxu0 0.0
        %874 = vmatpush1.msra.mxu0 0.0
        %875 = vmatprep.subr.mxu0 0.0
        %876 = vmatpush1.msra.mxu0 0.0
        %877 = vmatprep.subr.mxu0 0.0
        %878 = vmatpush1.msra.mxu0 0.0
        %879 = vmatprep.subr.mxu0 0.0
        %880 = vmatpush1.msra.mxu0 %v842
        %881 = vmatprep.subr.mxu0 0.0
        %882 = vmatpush2.msra.mxu0 0.0
        %883 = vmatprep.subr.mxu0 0.0
        %884 = vmatpush2.msra.mxu0 0.0
        %885 = vmatprep.subr.mxu0 0.0
        %886 = vmatpush2.msra.mxu0 0.0
        %887 = vmatprep.subr.mxu0 0.0
        %888 = vmatpush2.msra.mxu0 0.0
        %889 = vmatprep.subr.mxu0 0.0
        %890 = vmatpush2.msra.mxu0 0.0
        %891 = vmatprep.subr.mxu0 0.0
        %892 = vmatpush2.msra.mxu0 0.0
        %893 = vmatprep.subr.mxu0 0.0
        %894 = vmatpush2.msra.mxu0 0.0
        %895 = vmatprep.subr.mxu0 0.0
        %896 = vmatpush2.msra.mxu0 0.0
        %897 = vmatprep.subr.mxu0 0.0
        %898 = vmatpush2.msra.mxu0 0.0
        %899 = vmatprep.subr.mxu0 0.0
        %900 = vmatpush2.msra.mxu0 0.0
        %901 = vmatprep.subr.mxu0 0.0
        %902 = vmatpush2.msra.mxu0 0.0
        %903 = vmatprep.subr.mxu0 0.0
        %904 = vmatpush2.msra.mxu0 0.0
        %905 = vmatprep.subr.mxu0 0.0
        %906 = vmatpush2.msra.mxu0 0.0
        %907 = vmatprep.subr.mxu0 0.0
        %908 = vmatpush2.msra.mxu0 0.0
        %909 = vmatprep.subr.mxu0 0.0
        %910 = vmatpush2.msra.mxu0 0.0
        %911 = vmatprep.subr.mxu0 0.0
        %912 = vmatpush2.msra.mxu0 0.0
        %913 = vmatprep.mubr.f32.mxu0 0.0
        %914 = vmatmul.mubr.f32.gmra.mxu0 %v844
        %v915 = vpop.f32.mrf.mxu0
        %v916 = vadd.f32 0.0, %v915
        %v917 = vpop.f32.mrf.mxu0
        %918 = vmatprep.mubr.f32.mxu0 0.0
        %919 = vmatmul.mubr.f32.gmra.mxu0 %v847
        %v920 = vpop.f32.mrf.mxu0
        %v921 = vadd.f32 0.0, %v920
        %v922 = vpop.f32.mrf.mxu0
        %923 = vdwg.mxu0
        %v924 = vlaneseq
        %vm925 = vcmp.ge.s32.totalorder %v924, 0
        %vm926 = vcmp.lt.s32.totalorder %v924, 16
        %vm927 = vmand %vm925, %vm926
        %928 = vst.msk [vmem:[#allocation3] sm:$0x1] %vm927, %v916
        %v931 = vunpack.c.l.s4 1966171168
        %v932 = vunpack.c.0.s8 %v931
        %v933 = vlaneseq
        %v934 = vshrl.u32 %v933, 7
        %v935 = vsub.s32 %v932, %v934
        %v936 = vrot.slane %v916, %v935
        %v937 = vcombine.high %v936, %v936
        %v939 = vunpack.c.l.s4 1966171168
        %v940 = vunpack.c.0.s8 %v939
        %v941 = vlaneseq
        %v942 = vshrl.u32 %v941, 7
        %v943 = vsub.s32 %v940, %v942
        %v944 = vrot.slane %v936, %v943
        %v946 = vunpack.c.l.s4 1966171168
        %v947 = vunpack.c.0.s8 %v946
        %v948 = vlaneseq
        %v949 = vshrl.u32 %v948, 7
        %v950 = vsub.s32 %v947, %v949
        %v951 = vrot.slane %v937, %v950
        %952 = vrot.lane.b32.xlu0 %v951, 16
        %v953 = vpop.permute.xlu0 %952
        %vm955 = vcmp.ge.s32.totalorder %v924, 16
        %vm956 = vcmp.lt.s32.totalorder %v924, 32
        %vm957 = vmand %vm955, %vm956
        %958 = vst.msk [vmem:[#allocation3] sm:$0x1] %vm957, %v953
        %v959 = vcombine.high %v944, %v944
        %960 = vrot.lane.b32.xlu0 %v959, 32
        %v961 = vpop.permute.xlu0 %960
        %vm963 = vcmp.ge.s32.totalorder %v924, 32
        %vm964 = vcmp.lt.s32.totalorder %v924, 48
        %vm965 = vmand %vm963, %vm964
        %966 = vst.msk [vmem:[#allocation3] sm:$0x1] %vm965, %v961
        %v967 = vcombine.high %v951, %v951
        %968 = vrot.lane.b32.xlu0 %v967, 48
        %v969 = vpop.permute.xlu0 %968
        %vm971 = vcmp.ge.s32.totalorder %v924, 48
        %vm972 = vcmp.lt.s32.totalorder %v924, 64
        %vm973 = vmand %vm971, %vm972
        %974 = vst.msk [vmem:[#allocation3] sm:$0x1] %vm973, %v969
        %v975 = vcombine.high %v916, %v916
        %v977 = vunpack.c.l.s4 1966171168
        %v978 = vunpack.c.0.s8 %v977
        %v979 = vlaneseq
        %v980 = vshrl.u32 %v979, 7
        %v981 = vsub.s32 %v978, %v980
        %v982 = vrot.slane %v975, %v981
        %v984 = vunpack.c.l.s4 1966171168
        %v985 = vunpack.c.0.s8 %v984
        %v986 = vlaneseq
        %v987 = vshrl.u32 %v986, 7
        %v988 = vsub.s32 %v985, %v987
        %v989 = vrot.slane %v982, %v988
        %990 = vrot.lane.b32.xlu0 %v989, 64
        %v991 = vpop.permute.xlu0 %990
        %vm993 = vcmp.ge.s32.totalorder %v924, 64
        %vm994 = vcmp.lt.s32.totalorder %v924, 80
        %vm995 = vmand %vm993, %vm994
        %996 = vst.msk [vmem:[#allocation3] sm:$0x1] %vm995, %v991
        %v997 = vcombine.high %v982, %v982
        %v999 = vunpack.c.l.s4 1966171168
        %v1000 = vunpack.c.0.s8 %v999
        %v1001 = vlaneseq
        %v1002 = vshrl.u32 %v1001, 7
        %v1003 = vsub.s32 %v1000, %v1002
        %v1004 = vrot.slane %v997, %v1003
        %1005 = vrot.lane.b32.xlu0 %v1004, 80
        %v1006 = vpop.permute.xlu0 %1005
        %vm1008 = vcmp.ge.s32.totalorder %v924, 80
        %vm1009 = vcmp.lt.s32.totalorder %v924, 96
        %vm1010 = vmand %vm1008, %vm1009
        %1011 = vst.msk [vmem:[#allocation3] sm:$0x1] %vm1010, %v1006
        %v1012 = vcombine.high %v989, %v989
        %1013 = vrot.lane.b32.xlu0 %v1012, 96
        %v1014 = vpop.permute.xlu0 %1013
        %vm1016 = vcmp.ge.s32.totalorder %v924, 96
        %vm1017 = vcmp.lt.s32.totalorder %v924, 112
        %vm1018 = vmand %vm1016, %vm1017
        %1019 = vst.msk [vmem:[#allocation3] sm:$0x1] %vm1018, %v1014
        %v1020 = vcombine.high %v1004, %v1004
        %1021 = vrot.lane.b32.xlu0 %v1020, 112
        %v1022 = vpop.permute.xlu0 %1021
        %vm1024 = vcmp.ge.s32.totalorder %v924, 112
        %vm1025 = vcmp.lt.s32.totalorder %v924, 128
        %vm1026 = vmand %vm1024, %vm1025
        %1027 = vst.msk [vmem:[#allocation3] sm:$0x1] %vm1026, %v1022
        %1028 = vst.msk [vmem:[#allocation3 + $0x1] sm:$0x1] %vm927, %v921
        %v1031 = vunpack.c.l.s4 1966171168
        %v1032 = vunpack.c.0.s8 %v1031
        %v1033 = vlaneseq
        %v1034 = vshrl.u32 %v1033, 7
        %v1035 = vsub.s32 %v1032, %v1034
        %v1036 = vrot.slane %v921, %v1035
        %v1037 = vcombine.high %v1036, %v1036
        %v1039 = vunpack.c.l.s4 1966171168
        %v1040 = vunpack.c.0.s8 %v1039
        %v1041 = vlaneseq
        %v1042 = vshrl.u32 %v1041, 7
        %v1043 = vsub.s32 %v1040, %v1042
        %v1044 = vrot.slane %v1036, %v1043
        %v1046 = vunpack.c.l.s4 1966171168
        %v1047 = vunpack.c.0.s8 %v1046
        %v1048 = vlaneseq
        %v1049 = vshrl.u32 %v1048, 7
        %v1050 = vsub.s32 %v1047, %v1049
        %v1051 = vrot.slane %v1037, %v1050
        %1052 = vrot.lane.b32.xlu0 %v1051, 16
        %v1053 = vpop.permute.xlu0 %1052
        %1055 = vst.msk [vmem:[#allocation3 + $0x1] sm:$0x1] %vm957, %v1053
        %v1056 = vcombine.high %v1044, %v1044
        %1057 = vrot.lane.b32.xlu0 %v1056, 32
        %v1058 = vpop.permute.xlu0 %1057
        %1060 = vst.msk [vmem:[#allocation3 + $0x1] sm:$0x1] %vm965, %v1058
        %v1061 = vcombine.high %v1051, %v1051
        %1062 = vrot.lane.b32.xlu0 %v1061, 48
        %v1063 = vpop.permute.xlu0 %1062
        %1065 = vst.msk [vmem:[#allocation3 + $0x1] sm:$0x1] %vm973, %v1063
        %v1066 = vcombine.high %v921, %v921
        %v1068 = vunpack.c.l.s4 1966171168
        %v1069 = vunpack.c.0.s8 %v1068
        %v1070 = vlaneseq
        %v1071 = vshrl.u32 %v1070, 7
        %v1072 = vsub.s32 %v1069, %v1071
        %v1073 = vrot.slane %v1066, %v1072
        %v1075 = vunpack.c.l.s4 1966171168
        %v1076 = vunpack.c.0.s8 %v1075
        %v1077 = vlaneseq
        %v1078 = vshrl.u32 %v1077, 7
        %v1079 = vsub.s32 %v1076, %v1078
        %v1080 = vrot.slane %v1073, %v1079
        %1081 = vrot.lane.b32.xlu0 %v1080, 64
        %v1082 = vpop.permute.xlu0 %1081
        %1084 = vst.msk [vmem:[#allocation3 + $0x1] sm:$0x1] %vm995, %v1082
        %v1085 = vcombine.high %v1073, %v1073
        %v1087 = vunpack.c.l.s4 1966171168
        %v1088 = vunpack.c.0.s8 %v1087
        %v1089 = vlaneseq
        %v1090 = vshrl.u32 %v1089, 7
        %v1091 = vsub.s32 %v1088, %v1090
        %v1092 = vrot.slane %v1085, %v1091
        %1093 = vrot.lane.b32.xlu0 %v1092, 80
        %v1094 = vpop.permute.xlu0 %1093
        %1096 = vst.msk [vmem:[#allocation3 + $0x1] sm:$0x1] %vm1010, %v1094
        %v1097 = vcombine.high %v1080, %v1080
        %1098 = vrot.lane.b32.xlu0 %v1097, 96
        %v1099 = vpop.permute.xlu0 %1098
        %1101 = vst.msk [vmem:[#allocation3 + $0x1] sm:$0x1] %vm1018, %v1099
        %v1102 = vcombine.high %v1092, %v1092
        %1103 = vrot.lane.b32.xlu0 %v1102, 112
        %v1104 = vpop.permute.xlu0 %1103
        %1106 = vst.msk [vmem:[#allocation3 + $0x1] sm:$0x1] %vm1026, %v1104
        %v1107 = vld [vmem:[#allocation10] sm:$0xf]
        %v1108 = vld [vmem:[%s529] sm:$0xff]
        %v1110 = vunpack.c.l.b16 %v1108
        %v1111 = vunpack.c.h.b16 %v1108
        %v1112 = vpack.c.b16 %v1110, %v1110
        %v1113 = vpack.c.b16 %v1111, %v1111
        %v1115 = vsel %vm760, %v1107, 0
        %vm1117 = vcmask 1043456
        %v1119 = vsel %vm1117, %v1112, 0
        %v1122 = vsel %vm1117, %v1113, 0
        %1124 = vmatprep.subr.bf16.mxu0 0
        %1125 = vmatpush1.bf16.msra.mxu0 0
        %1126 = vmatprep.subr.bf16.mxu0 0
        %1127 = vmatpush1.bf16.msra.mxu0 0
        %1128 = vmatprep.subr.bf16.mxu0 0
        %1129 = vmatpush1.bf16.msra.mxu0 0
        %1130 = vmatprep.subr.bf16.mxu0 0
        %1131 = vmatpush1.bf16.msra.mxu0 0
        %1132 = vmatprep.subr.bf16.mxu0 0
        %1133 = vmatpush1.bf16.msra.mxu0 0
        %1134 = vmatprep.subr.bf16.mxu0 0
        %1135 = vmatpush1.bf16.msra.mxu0 0
        %1136 = vmatprep.subr.bf16.mxu0 0
        %1137 = vmatpush1.bf16.msra.mxu0 0
        %1138 = vmatprep.subr.bf16.mxu0 %v1122
        %1139 = vmatpush1.bf16.msra.mxu0 %v1119
        %1140 = vmatprep.subr.bf16.mxu0 0
        %1141 = vmatpush2.bf16.msra.mxu0 0
        %1142 = vmatprep.subr.bf16.mxu0 0
        %1143 = vmatpush2.bf16.msra.mxu0 0
        %1144 = vmatprep.subr.bf16.mxu0 0
        %1145 = vmatpush2.bf16.msra.mxu0 0
        %1146 = vmatprep.subr.bf16.mxu0 0
        %1147 = vmatpush2.bf16.msra.mxu0 0
        %1148 = vmatprep.subr.bf16.mxu0 0
        %1149 = vmatpush2.bf16.msra.mxu0 0
        %1150 = vmatprep.subr.bf16.mxu0 0
        %1151 = vmatpush2.bf16.msra.mxu0 0
        %1152 = vmatprep.subr.bf16.mxu0 0
        %1153 = vmatpush2.bf16.msra.mxu0 0
        %1154 = vmatprep.subr.bf16.mxu0 0
        %1155 = vmatpush2.bf16.msra.mxu0 0
        %1156 = vmatprep.mubr.bf16.mxu0 0
        %1157 = vmatmul.mubr.bf16.gmra.mxu0 %v1115
        %v1158 = vpop.f32.mrf.mxu0
        %v1159 = vadd.f32 0.0, %v1158
        %v1160 = vpop.f32.mrf.mxu0
        %v1161 = vadd.f32 0.0, %v1160
        %v1162 = vpop.f32.mrf.mxu0
        %v1163 = vpop.f32.mrf.mxu0
        %1164 = vdwg.mxu0
        %v1165 = vld [vmem:[#allocation3] sm:$0x3]
        %v1167 = vlaneseq
        %v1168 = vshrl.u32 %v1167, 7
        %v1169 = vsub.s32 0, %v1168
        %v1170 = vrot.slane %v1165, %v1169
        %v1171 = vlaneseq
        %v1172 = vshrl.u32 %v1171, 7
        %v1173 = vsub.s32 1, %v1172
        %v1174 = vrot.slane %v1165, %v1173
        %v1177 = vmul.f32 %v1170, %v1159
        %v1178 = vmul.f32 %v1174, %v1161
        %v1179 = vld [vmem:[%s9] sm:$0xff]
        %1181 = vset.pattern.permute.xlu0 0
        %1182 = vperm.xlu0 %1181, %v1179
        %v1183 = vpop.permute.xlu0 %1182
        %v1185 = vadd.f32 %v1177, %v1183
        %v1186 = vadd.f32 %v1178, %v1183
        %1187 = vst [vmem:[%s512] sm:$0xff] %v1185
        %1188 = vst [vmem:[%s512 + $0x8] sm:$0xff] %v1186
        %s1189 = sand.u32 %s325, 1
        %s1190 = scalar_lea.sflag [#allocation7], %s1189
        %s1191 = sand.u32 %s325, 1
        %s1192 = smul.addr %s1191, 16
        %s1193 = scalar_lea.vmem [#allocation11], %s1192
        // Predicated region
        $region85: #{tpu_custom_call.1} parent=67 // pred_check
          %p1194 = pneg %p335
        $region86: #{tpu_custom_call.1} parent=67 // pred_check_branch
          %1196 = sbr.rel (%p1194) target = $region88
        $region87: #{tpu_custom_call.1} parent=67 // pred_region
          %s1197 = smul.u32 2, %s34
          %s1199 = ssub.s32 256, 256
          %1200 = vsyncadd %s1190, %s1199
          %s1201 = smul.addr %s33, 2
          %s1202 = sadd.s32 %s1197, %s1201
          %s1203 = smul.addr %s1202, 128
          %s1204 = scalar_lea.hbm %s12, %s1203
          %s1206 = sshll.u32 %s1193, 4
          %s1207 = int_to_ptr.vmem [resolvable:$true] %s1206
          %1209 = dma.vmem_to_hbm [thread:$0]  %s1207, 256, %s1204, %s1190
        $region88: #{tpu_custom_call.1} parent=67 // pred_fallthru
          _
      $region68: #{tpu_custom_call.1} parent=5 // pred_fallthru
        _
      %p1210 = scmp.le.s32.totalorder 2, %s24
      // Predicated region
      $region89: #{tpu_custom_call.1} parent=5 // pred_check
        %p1211 = pneg %p1210
      $region90: #{tpu_custom_call.1} parent=5 // pred_check_branch
        %1213 = sbr.rel (%p1211) target = $region92
      $region91: #{tpu_custom_call.1} parent=5 // pred_region
        %s1214 = ssub.s32 %s24, 2
        // Predicated region
        $region93: #{tpu_custom_call.1} parent=91 // pred_check
          %p1215 = pneg %p341
        $region94: #{tpu_custom_call.1} parent=91 // pred_check_branch
          %1217 = sbr.rel (%p1215) target = $region96
        $region95: #{tpu_custom_call.1} parent=91 // pred_region
          %s1218 = sand.u32 %s326, 1
          %s1219 = scalar_lea.sflag [#allocation7], %s1218
          %s1220 = sand.u32 %s326, 1
          %s1221 = smul.addr %s1220, 16
          %s1222 = scalar_lea.vmem [#allocation11], %s1221
          %1223 = dma.done %s1219, 256
        $region96: #{tpu_custom_call.1} parent=91 // pred_fallthru
          _
      $region92: #{tpu_custom_call.1} parent=5 // pred_fallthru
        _
    $region6: #{tpu_custom_call.1} parent=1 // loop_footer
      %s28 = sadd.s32 1, %s24
    $region7: #{tpu_custom_call.1} parent=1 // loop_footer_branch
      %23 = sbr.rel target = $region3
    $region8: #{tpu_custom_call.1} parent=1 // loop_exit
      _
    %1224 = vsyncpa [#allocation6], 1
    %s1225 = scalar_lea.sflag [#allocation6], 1
    %1226 = vsyncpa %s1225, 1
    %1227 = vsyncpa [#allocation9], 1
    %1228 = vsyncpa [#allocation7], 1
    %s1229 = scalar_lea.sflag [#allocation7], 1
    %1230 = vsyncpa %s1229, 1

</llo_original>
